<compile_context>
chip_gen: v7x
topology: tpu7x:2x2x1
jax: 0.10.0
libtpu: 0.0.40
codegen_flags: <defaults>
</compile_context>

<pallas_src>
import functools
import math

import jax
import jax.numpy as jnp
from jax import lax
from jax.experimental import pallas as pl
from jax.experimental.pallas import tpu as pltpu


# ---------------------------------------------------------------------------
# In-kernel helpers (f32 math)
# ---------------------------------------------------------------------------
def _layernorm(x, g, b, eps=1e-5):
    # PyTorch LayerNorm: biased variance, eps=1e-5.  x: [M, H], g/b: [1, H]
    mean = jnp.mean(x, axis=-1, keepdims=True)
    var = jnp.mean((x - mean) ** 2, axis=-1, keepdims=True)
    return (x - mean) * lax.rsqrt(var + eps) * g + b


def _gelu_exact(x):
    # nn.GELU() default: exact erf-based GELU
    return 0.5 * x * (1.0 + lax.erf(x * (1.0 / math.sqrt(2.0))))


# ---------------------------------------------------------------------------
# Fused multi-layer transformer kernel.
# Grid: (row_tiles, num_layers).  Row axis is "parallel"; layer axis is
# "arbitrary" (sequential) and streams that layer's stacked weights.
# The activation row-tile lives in VMEM scratch across the layer axis.
# ---------------------------------------------------------------------------
def _transformer_kernel(x_ref,
                        ln1g_ref, ln1b_ref,
                        wqkv_ref, bqkv_ref, wo_ref, bo_ref,
                        ln2g_ref, ln2b_ref,
                        w1_ref, b1_ref, w2_ref, b2_ref,
                        fing_ref, finb_ref,
                        o_ref,
                        act_ref,
                        *, num_heads, head_dim, block_b):
    layer = pl.program_id(1)
    bf16 = jnp.bfloat16
    M, H = x_ref.shape            # M = block_b * S
    S = M // block_b

    # Layer 0: pull the row-tile from HBM input into the resident VMEM carry.
    @pl.when(layer == 0)
    def _():
        act_ref[...] = x_ref[...]

    x = act_ref[...]                                          # [M, H] f32

    # ---- attention branch (pre-LN) ----
    h = _layernorm(x, ln1g_ref[...], ln1b_ref[...])
    # Fused QKV projection; 1/sqrt(head_dim) is already folded into the
    # q-third of wqkv/bqkv at prep time.  Single bf16 cast of qkv.
    qkv = (jnp.dot(h.astype(bf16), wqkv_ref[...],
                   preferred_element_type=jnp.float32)
           + bqkv_ref[...]).astype(bf16)                      # [M, 3H]

    def to_heads(t):
        # [M, H] -> [num_heads*block_b, S, head_dim] via one reshape + one
        # major-dim transpose (no per-head slicing/stacking).
        return (t.reshape(M, num_heads, head_dim)
                 .transpose(1, 0, 2)
                 .reshape(num_heads * block_b, S, head_dim))

    q = to_heads(qkv[:, 0 * H:1 * H])
    k = to_heads(qkv[:, 1 * H:2 * H])
    v = to_heads(qkv[:, 2 * H:3 * H])

    # head-batched attention: batched MXU contractions + exact softmax
    s = jnp.einsum("bqd,bkd->bqk", q, k,
                   preferred_element_type=jnp.float32)        # [hb, S, S]
    s = s - jnp.max(s, axis=-1, keepdims=True)
    p = jnp.exp(s)
    p = p / jnp.sum(p, axis=-1, keepdims=True)                # exact softmax
    o = jnp.einsum("bqk,bkd->bqd", p.astype(bf16), v,
                   preferred_element_type=jnp.float32)        # [hb, S, d]

    # merge heads: [num_heads*block_b, S, d] -> [M, H]
    attn = (o.reshape(num_heads, M, head_dim)
             .transpose(1, 0, 2)
             .reshape(M, H))

    attn = jnp.dot(attn.astype(bf16), wo_ref[...],
                   preferred_element_type=jnp.float32) + bo_ref[...]
    x = x + attn                                              # residual 1

    # ---- FFN branch (pre-LN) ----
    h2 = _layernorm(x, ln2g_ref[...], ln2b_ref[...])
    f = jnp.dot(h2.astype(bf16), w1_ref[...],
                preferred_element_type=jnp.float32) + b1_ref[...]
    f = _gelu_exact(f)
    f = jnp.dot(f.astype(bf16), w2_ref[...],
                preferred_element_type=jnp.float32) + b2_ref[...]
    x = x + f                                                 # residual 2

    act_ref[...] = x                                          # carry to next layer

    # Fused final LayerNorm; single HBM writeback after the last layer.
    @pl.when(layer == pl.num_programs(1) - 1)
    def _():
        o_ref[...] = _layernorm(x, fing_ref[...], finb_ref[...]).astype(o_ref.dtype)


# ---------------------------------------------------------------------------
# One-time parameter prep (hoisted out of the forward path).
# ---------------------------------------------------------------------------
def prep_params(params, num_heads):
    """Stack per-layer params to [L, ...], fuse QKV, fold the attention scale
    into the q projection, and cast matmul weights to bf16."""
    bf16 = jnp.bfloat16
    layers = params["layers"]
    H = layers[0]["wq"].shape[0]
    scale = float(H // num_heads) ** -0.5

    def stack(key):
        return jnp.stack([lp[key] for lp in layers], axis=0)

    wqkv = jnp.stack(
        [jnp.concatenate([lp["wq"] * scale, lp["wk"], lp["wv"]], axis=1)
         for lp in layers], axis=0).astype(bf16)               # [L, H, 3H]
    bqkv = jnp.stack(
        [jnp.concatenate([lp["bq"] * scale, lp["bk"], lp["bv"]], axis=1)
         for lp in layers], axis=0)                            # [L, 1, 3H]

    return dict(
        ln1_g=stack("ln1_g"), ln1_b=stack("ln1_b"),
        wqkv=wqkv, bqkv=bqkv,
        wo=stack("wo").astype(bf16), bo=stack("bo"),
        ln2_g=stack("ln2_g"), ln2_b=stack("ln2_b"),
        w1=stack("w1").astype(bf16), b1=stack("b1"),
        w2=stack("w2").astype(bf16), b2=stack("b2"),
        final_g=params["final_g"], final_b=params["final_b"],
    )


def _pick_block_b(B, S, target_rows=512):
    # Largest batch sub-tile with row count <= target_rows, rows a multiple of
    # 8 sublanes (or full extent), preferring >= 2 grid steps so the parallel
    # axis can shard across v7x's two TensorCores.
    cands = [c for c in range(1, B + 1)
             if B % c == 0 and ((c * S) % 8 == 0 or c == B)]
    pref = [c for c in cands if c * S <= target_rows and B // c >= 2]
    if pref:
        return max(pref)
    small = [c for c in cands if c * S <= target_rows]
    return max(small) if small else min(cands)


# ---------------------------------------------------------------------------
# Forward wrapper: one pallas_call for the whole stack.
# ---------------------------------------------------------------------------
def efficient_transformer(x, prepped, num_heads, *, block_b=None):
    B, S, H = x.shape
    assert H % num_heads == 0
    head_dim = H // num_heads
    L = prepped["wqkv"].shape[0]
    bb = _pick_block_b(B, S) if block_b is None else block_b
    rows = bb * S

    kernel = functools.partial(_transformer_kernel, num_heads=num_heads,
                               head_dim=head_dim, block_b=bb)

    weight_args = [prepped["ln1_g"], prepped["ln1_b"],
                   prepped["wqkv"], prepped["bqkv"],
                   prepped["wo"], prepped["bo"],
                   prepped["ln2_g"], prepped["ln2_b"],
                   prepped["w1"], prepped["b1"],
                   prepped["w2"], prepped["b2"]]

    def layer_select(nd):
        # stacked [L, ...] weight: squeezed layer dim selected by grid axis 1
        return lambda i, l: (l,) + (0,) * nd

    in_specs = [pl.BlockSpec((rows, H), lambda i, l: (i, 0))]      # activations
    in_specs += [pl.BlockSpec((None,) + w.shape[1:], layer_select(w.ndim - 1))
                 for w in weight_args]
    in_specs += [pl.BlockSpec(prepped["final_g"].shape, lambda i, l: (0, 0)),
                 pl.BlockSpec(prepped["final_b"].shape, lambda i, l: (0, 0))]

    nh = num_heads
    flops = int(L * (24 * B * S * H * H + 4 * B * S * S * H))
    transcendentals = int(L * (B * nh * S * S + 4 * B * S * H + 2 * B * S))
    bytes_accessed = int(8 * B * S * H + L * (24 * H * H + 64 * H))

    xf = x.reshape(B * S, H)
    yf = pl.pallas_call(
        kernel,
        out_shape=jax.ShapeDtypeStruct((B * S, H), x.dtype),
        grid=(B // bb, L),
        in_specs=in_specs,
        out_specs=pl.BlockSpec((rows, H), lambda i, l: (i, 0)),
        scratch_shapes=[pltpu.VMEM((rows, H), jnp.float32)],      # resident act
        compiler_params=pltpu.CompilerParams(
            dimension_semantics=("parallel", "arbitrary"),
            vmem_limit_bytes=48 * 1024 * 1024),
        cost_estimate=pl.CostEstimate(
            flops=flops, transcendentals=transcendentals,
            bytes_accessed=bytes_accessed),
    )(xf, *weight_args, prepped["final_g"], prepped["final_b"])
    return yf.reshape(B, S, H)


# ---------------------------------------------------------------------------
# Deterministic parameter init (PyTorch-default-like uniform bounds)
# ---------------------------------------------------------------------------
def _linear(key, fan_in, fan_out):
    kw, kb = jax.random.split(key)
    bound = 1.0 / math.sqrt(fan_in)
    # stored as [in, out] (transpose of torch's [out, in])
    w = jax.random.uniform(kw, (fan_in, fan_out), jnp.float32, -bound, bound)
    b = jax.random.uniform(kb, (1, fan_out), jnp.float32, -bound, bound)
    return w, b


def init_params(key, hidden_size, num_layers):
    H = hidden_size
    layers = []
    for _ in range(num_layers):
        key, *ks = jax.random.split(key, 7)
        wq, bq = _linear(ks[0], H, H)
        wk, bk = _linear(ks[1], H, H)
        wv, bv = _linear(ks[2], H, H)
        wo, bo = _linear(ks[3], H, H)
        w1, b1 = _linear(ks[4], H, 4 * H)
        w2, b2 = _linear(ks[5], 4 * H, H)
        layers.append(dict(
            ln1_g=jnp.ones((1, H), jnp.float32), ln1_b=jnp.zeros((1, H), jnp.float32),
            wq=wq, bq=bq, wk=wk, bk=bk, wv=wv, bv=bv, wo=wo, bo=bo,
            ln2_g=jnp.ones((1, H), jnp.float32), ln2_b=jnp.zeros((1, H), jnp.float32),
            w1=w1, b1=b1, w2=w2, b2=b2,
        ))
    return dict(layers=layers,
                final_g=jnp.ones((1, H), jnp.float32),
                final_b=jnp.zeros((1, H), jnp.float32))


# ---------------------------------------------------------------------------
# Pure-JAX reference (mirrors bf16 matmuls / f32 accumulation; exact softmax)
# ---------------------------------------------------------------------------
def _ref_forward(x, params, num_heads):
    bf16 = jnp.bfloat16

    def ln(t, g, b, eps=1e-5):
        m = jnp.mean(t, -1, keepdims=True)
        v = jnp.mean((t - m) ** 2, -1, keepdims=True)
        return (t - m) * lax.rsqrt(v + eps) * g + b

    def mm(a, w):
        return jnp.dot(a.astype(bf16), w.astype(bf16),
                       preferred_element_type=jnp.float32)

    B, S, H = x.shape
    d = H // num_heads
    for p in params["layers"]:
        h = ln(x, p["ln1_g"], p["ln1_b"])
        q = (mm(h, p["wq"]) + p["bq"]).reshape(B, S, num_heads, d).transpose(0, 2, 1, 3)
        k = (mm(h, p["wk"]) + p["bk"]).reshape(B, S, num_heads, d).transpose(0, 2, 1, 3)
        v = (mm(h, p["wv"]) + p["bv"]).reshape(B, S, num_heads, d).transpose(0, 2, 1, 3)
        s = jnp.einsum("bhqd,bhkd->bhqk", q.astype(bf16), k.astype(bf16),
                       preferred_element_type=jnp.float32) * (d ** -0.5)
        a = jax.nn.softmax(s, axis=-1)
        o = jnp.einsum("bhqk,bhkd->bhqd", a.astype(bf16), v.astype(bf16),
                       preferred_element_type=jnp.float32)
        o = o.transpose(0, 2, 1, 3).reshape(B, S, H)
        x = x + (mm(o, p["wo"]) + p["bo"])
        h2 = ln(x, p["ln2_g"], p["ln2_b"])
        f = mm(h2, p["w1"]) + p["b1"]
        f = jax.nn.gelu(f, approximate=False)
        x = x + (mm(f, p["w2"]) + p["b2"])
    return ln(x, params["final_g"], params["final_b"])


if __name__ == "__main__":
    key = jax.random.PRNGKey(0)
    B, S, H = 2, 8, 32
    num_heads, num_layers = 4, 2

    kx, kp = jax.random.split(key)
    x = jax.random.normal(kx, (B, S, H), jnp.float32)
    params = init_params(kp, H, num_layers)

    # parameter prep hoisted out of the forward path (done once, cached)
    prepped = prep_params(params, num_heads)

    fwd = jax.jit(lambda xx, pp: efficient_transformer(xx, pp, num_heads))
    y = fwd(x, prepped)
    jax.block_until_ready(y)

    y_ref = _ref_forward(x, params, num_heads)
    assert y.shape == (B, S, H)
    assert bool(jnp.isfinite(y).all()), "non-finite output"
    # tolerance covers bf16 matmul rounding (incl. the host-side scale fold)
    assert jnp.allclose(y, y_ref, rtol=3e-2, atol=3e-2), "mismatch vs pure-JAX reference"

    print("KERNEL_OK")
</pallas_src>

<mosaic_0001>
module attributes {stable_mosaic.version = 11 : i64} {
  func.func @_transformer_kernel(%arg0: i32, %arg1: i32, %arg2: memref<8x32xf32, #tpu.memory_space<vmem>>, %arg3: memref<1x1x32xf32, #tpu.memory_space<vmem>>, %arg4: memref<1x1x32xf32, #tpu.memory_space<vmem>>, %arg5: memref<1x32x96xbf16, #tpu.memory_space<vmem>>, %arg6: memref<1x1x96xf32, #tpu.memory_space<vmem>>, %arg7: memref<1x32x32xbf16, #tpu.memory_space<vmem>>, %arg8: memref<1x1x32xf32, #tpu.memory_space<vmem>>, %arg9: memref<1x1x32xf32, #tpu.memory_space<vmem>>, %arg10: memref<1x1x32xf32, #tpu.memory_space<vmem>>, %arg11: memref<1x32x128xbf16, #tpu.memory_space<vmem>>, %arg12: memref<1x1x128xf32, #tpu.memory_space<vmem>>, %arg13: memref<1x128x32xbf16, #tpu.memory_space<vmem>>, %arg14: memref<1x1x32xf32, #tpu.memory_space<vmem>>, %arg15: memref<1x32xf32, #tpu.memory_space<vmem>>, %arg16: memref<1x32xf32, #tpu.memory_space<vmem>>, %arg17: memref<8x32xf32, #tpu.memory_space<vmem>>, %arg18: memref<8x32xf32, #tpu.memory_space<vmem>>) attributes {dimension_semantics = [#tpu.dimension_semantics<parallel>, #tpu.dimension_semantics<arbitrary>], iteration_bounds = array<i64: 2, 2>, scalar_prefetch = 0 : i64, scratch_operands = 1 : i64, tpu.core_type = #tpu.core_type<tc>, window_params = [{transform_indices = @transform_0, window_bounds = array<i64: 8, 32>}, {transform_indices = @transform_1, window_bounds = array<i64: 1, 1, 32>}, {transform_indices = @transform_2, window_bounds = array<i64: 1, 1, 32>}, {transform_indices = @transform_3, window_bounds = array<i64: 1, 32, 96>}, {transform_indices = @transform_4, window_bounds = array<i64: 1, 1, 96>}, {transform_indices = @transform_5, window_bounds = array<i64: 1, 32, 32>}, {transform_indices = @transform_6, window_bounds = array<i64: 1, 1, 32>}, {transform_indices = @transform_7, window_bounds = array<i64: 1, 1, 32>}, {transform_indices = @transform_8, window_bounds = array<i64: 1, 1, 32>}, {transform_indices = @transform_9, window_bounds = array<i64: 1, 32, 128>}, {transform_indices = @transform_10, window_bounds = array<i64: 1, 1, 128>}, {transform_indices = @transform_11, window_bounds = array<i64: 1, 128, 32>}, {transform_indices = @transform_12, window_bounds = array<i64: 1, 1, 32>}, {pipeline_mode = #tpu.pipeline_mode<synchronous>, transform_indices = @transform_13, window_bounds = array<i64: 1, 32>}, {pipeline_mode = #tpu.pipeline_mode<synchronous>, transform_indices = @transform_14, window_bounds = array<i64: 1, 32>}, {transform_indices = @transform_15, window_bounds = array<i64: 8, 32>}]} {
    %c0_i32 = arith.constant 0 : i32
    %0 = arith.cmpi eq, %arg1, %c0_i32 : i32
    %1 = arith.extui %0 : i1 to i32
    %c0_i32_0 = arith.constant 0 : i32
    %2 = arith.cmpi ne, %1, %c0_i32_0 : i32
    scf.if %2 {
      %c0_61 = arith.constant 0 : index
      %c0_62 = arith.constant 0 : index
      %126 = vector.load %arg2[%c0_61, %c0_62] : memref<8x32xf32, #tpu.memory_space<vmem>>, vector<8x32xf32>
      %c0_63 = arith.constant 0 : index
      %c0_64 = arith.constant 0 : index
      %127 = vector.load %arg18[%c0_63, %c0_64] : memref<8x32xf32, #tpu.memory_space<vmem>>, vector<8x32xf32>
      tpu.vector_store %arg18[%c0_63, %c0_64], %126 {strides = array<i32>} : memref<8x32xf32, #tpu.memory_space<vmem>>, vector<8x32xf32>,
    } else {
    }
    %c0 = arith.constant 0 : index
    %c0_1 = arith.constant 0 : index
    %3 = vector.load %arg18[%c0, %c0_1] : memref<8x32xf32, #tpu.memory_space<vmem>>, vector<8x32xf32>
    %c0_2 = arith.constant 0 : index
    %c0_3 = arith.constant 0 : index
    %c0_4 = arith.constant 0 : index
    %4 = vector.load %arg3[%c0_2, %c0_3, %c0_4] : memref<1x1x32xf32, #tpu.memory_space<vmem>>, vector<1x1x32xf32>
    %5 = vector.shape_cast %4 : vector<1x1x32xf32> to vector<1x32xf32>
    %c0_5 = arith.constant 0 : index
    %c0_6 = arith.constant 0 : index
    %c0_7 = arith.constant 0 : index
    %6 = vector.load %arg4[%c0_5, %c0_6, %c0_7] : memref<1x1x32xf32, #tpu.memory_space<vmem>>, vector<1x1x32xf32>
    %7 = vector.shape_cast %6 : vector<1x1x32xf32> to vector<1x32xf32>
    %cst = arith.constant dense<0.000000e+00> : vector<8xf32>
    %8 = vector.multi_reduction <add>, %3, %cst [1] : vector<8x32xf32> to vector<8xf32>
    %9 = vector.shape_cast %8 : vector<8xf32> to vector<8x1xf32>
    %cst_8 = arith.constant 3.200000e+01 : f32
    %10 = vector.broadcast %cst_8 : f32 to vector<8x1xf32>
    %11 = arith.divf %9, %10 : vector<8x1xf32>
    %12 = vector.broadcast %11 : vector<8x1xf32> to vector<8x32xf32>
    %13 = arith.subf %3, %12 : vector<8x32xf32>
    %14 = arith.mulf %13, %13 : vector<8x32xf32>
    %cst_9 = arith.constant dense<0.000000e+00> : vector<8xf32>
    %15 = vector.multi_reduction <add>, %14, %cst_9 [1] : vector<8x32xf32> to vector<8xf32>
    %16 = vector.shape_cast %15 : vector<8xf32> to vector<8x1xf32>
    %cst_10 = arith.constant 3.200000e+01 : f32
    %17 = vector.broadcast %cst_10 : f32 to vector<8x1xf32>
    %18 = arith.divf %16, %17 : vector<8x1xf32>
    %19 = vector.broadcast %11 : vector<8x1xf32> to vector<8x32xf32>
    %20 = arith.subf %3, %19 : vector<8x32xf32>
    %cst_11 = arith.constant 9.99999974E-6 : f32
    %21 = vector.broadcast %cst_11 : f32 to vector<8x1xf32>
    %22 = arith.addf %18, %21 : vector<8x1xf32>
    %23 = math.rsqrt %22 : vector<8x1xf32>
    %24 = vector.broadcast %23 : vector<8x1xf32> to vector<8x32xf32>
    %25 = arith.mulf %20, %24 : vector<8x32xf32>
    %26 = vector.broadcast %5 : vector<1x32xf32> to vector<8x32xf32>
    %27 = arith.mulf %25, %26 : vector<8x32xf32>
    %28 = vector.broadcast %7 : vector<1x32xf32> to vector<8x32xf32>
    %29 = arith.addf %27, %28 : vector<8x32xf32>
    %30 = arith.truncf %29 : vector<8x32xf32> to vector<8x32xbf16>
    %c0_12 = arith.constant 0 : index
    %c0_13 = arith.constant 0 : index
    %c0_14 = arith.constant 0 : index
    %31 = vector.load %arg5[%c0_12, %c0_13, %c0_14] : memref<1x32x96xbf16, #tpu.memory_space<vmem>>, vector<1x32x96xbf16>
    %32 = vector.shape_cast %31 : vector<1x32x96xbf16> to vector<32x96xbf16>
    %cst_15 = arith.constant dense<0.000000e+00> : vector<8x96xf32>
    %33 = tpu.matmul %30, %32, %cst_15 {dimension_numbers = #tpu.dot_dimension_numbers<[1], [0], [0], [1], [0, 0, 1, 1], [], []>} : vector<8x32xbf16>, vector<32x96xbf16>, vector<8x96xf32> -> vector<8x96xf32>
    %c0_16 = arith.constant 0 : index
    %c0_17 = arith.constant 0 : index
    %c0_18 = arith.constant 0 : index
    %34 = vector.load %arg6[%c0_16, %c0_17, %c0_18] : memref<1x1x96xf32, #tpu.memory_space<vmem>>, vector<1x1x96xf32>
    %35 = vector.shape_cast %34 : vector<1x1x96xf32> to vector<1x96xf32>
    %36 = vector.broadcast %35 : vector<1x96xf32> to vector<8x96xf32>
    %37 = arith.addf %33, %36 : vector<8x96xf32>
    %38 = arith.truncf %37 : vector<8x96xf32> to vector<8x96xbf16>
    %39 = vector.extract_strided_slice %38 {offsets = [0, 0], sizes = [8, 32], strides = [1, 1]} : vector<8x96xbf16> to vector<8x32xbf16>
    %40 = vector.shape_cast %39 : vector<8x32xbf16> to vector<8x4x8xbf16>
    %41 = tpu.transpose %40, [1, 0, 2] : vector<8x4x8xbf16> -> vector<4x8x8xbf16>
    %42 = vector.extract_strided_slice %38 {offsets = [0, 32], sizes = [8, 32], strides = [1, 1]} : vector<8x96xbf16> to vector<8x32xbf16>
    %43 = vector.shape_cast %42 : vector<8x32xbf16> to vector<8x4x8xbf16>
    %44 = tpu.transpose %43, [1, 0, 2] : vector<8x4x8xbf16> -> vector<4x8x8xbf16>
    %45 = vector.extract_strided_slice %38 {offsets = [0, 64], sizes = [8, 32], strides = [1, 1]} : vector<8x96xbf16> to vector<8x32xbf16>
    %46 = vector.shape_cast %45 : vector<8x32xbf16> to vector<8x4x8xbf16>
    %47 = tpu.transpose %46, [1, 0, 2] : vector<8x4x8xbf16> -> vector<4x8x8xbf16>
    "tpu.trace_start"() <{level = 10 : i32, message = "bqd,bkd->bqk"}> : () -> ()
    %cst_19 = arith.constant dense<0.000000e+00> : vector<4x8x8xf32>
    %48 = tpu.matmul %41, %44, %cst_19 {dimension_numbers = #tpu.dot_dimension_numbers<[2], [2], [1], [1], [0, 0, 0, 1, 1, 1], [0], [0]>} : vector<4x8x8xbf16>, vector<4x8x8xbf16>, vector<4x8x8xf32> -> vector<4x8x8xf32>
    "tpu.trace_stop"() : () -> ()
    %cst_20 = arith.constant dense<0xFF800000> : vector<4x8xf32>
    %49 = vector.multi_reduction <maximumf>, %48, %cst_20 [2] : vector<4x8x8xf32> to vector<4x8xf32>
    %50 = vector.shape_cast %49 : vector<4x8xf32> to vector<4x8x1xf32>
    %51 = vector.broadcast %50 : vector<4x8x1xf32> to vector<4x8x8xf32>
    %52 = arith.subf %48, %51 : vector<4x8x8xf32>
    %53 = math.exp %52 : vector<4x8x8xf32>
    %cst_21 = arith.constant dense<0.000000e+00> : vector<4x8xf32>
    %54 = vector.multi_reduction <add>, %53, %cst_21 [2] : vector<4x8x8xf32> to vector<4x8xf32>
    %55 = vector.shape_cast %54 : vector<4x8xf32> to vector<4x8x1xf32>
    %56 = vector.broadcast %55 : vector<4x8x1xf32> to vector<4x8x8xf32>
    %57 = arith.divf %53, %56 : vector<4x8x8xf32>
    %58 = arith.truncf %57 : vector<4x8x8xf32> to vector<4x8x8xbf16>
    "tpu.trace_start"() <{level = 10 : i32, message = "bqk,bkd->bqd"}> : () -> ()
    %cst_22 = arith.constant dense<0.000000e+00> : vector<4x8x8xf32>
    %59 = tpu.matmul %58, %47, %cst_22 {dimension_numbers = #tpu.dot_dimension_numbers<[2], [1], [1], [2], [0, 0, 0, 1, 1, 2], [0], [0]>} : vector<4x8x8xbf16>, vector<4x8x8xbf16>, vector<4x8x8xf32> -> vector<4x8x8xf32>
    "tpu.trace_stop"() : () -> ()
    %60 = tpu.transpose %59, [1, 0, 2] : vector<4x8x8xf32> -> vector<8x4x8xf32>
    %61 = vector.shape_cast %60 : vector<8x4x8xf32> to vector<8x32xf32>
    %62 = arith.truncf %61 : vector<8x32xf32> to vector<8x32xbf16>
    %c0_23 = arith.constant 0 : index
    %c0_24 = arith.constant 0 : index
    %c0_25 = arith.constant 0 : index
    %63 = vector.load %arg7[%c0_23, %c0_24, %c0_25] : memref<1x32x32xbf16, #tpu.memory_space<vmem>>, vector<1x32x32xbf16>
    %64 = vector.shape_cast %63 : vector<1x32x32xbf16> to vector<32x32xbf16>
    %cst_26 = arith.constant dense<0.000000e+00> : vector<8x32xf32>
    %65 = tpu.matmul %62, %64, %cst_26 {dimension_numbers = #tpu.dot_dimension_numbers<[1], [0], [0], [1], [0, 0, 1, 1], [], []>} : vector<8x32xbf16>, vector<32x32xbf16>, vector<8x32xf32> -> vector<8x32xf32>
    %c0_27 = arith.constant 0 : index
    %c0_28 = arith.constant 0 : index
    %c0_29 = arith.constant 0 : index
    %66 = vector.load %arg8[%c0_27, %c0_28, %c0_29] : memref<1x1x32xf32, #tpu.memory_space<vmem>>, vector<1x1x32xf32>
    %67 = vector.shape_cast %66 : vector<1x1x32xf32> to vector<1x32xf32>
    %68 = vector.broadcast %67 : vector<1x32xf32> to vector<8x32xf32>
    %69 = arith.addf %65, %68 : vector<8x32xf32>
    %70 = arith.addf %3, %69 : vector<8x32xf32>
    %c0_30 = arith.constant 0 : index
    %c0_31 = arith.constant 0 : index
    %c0_32 = arith.constant 0 : index
    %71 = vector.load %arg9[%c0_30, %c0_31, %c0_32] : memref<1x1x32xf32, #tpu.memory_space<vmem>>, vector<1x1x32xf32>
    %72 = vector.shape_cast %71 : vector<1x1x32xf32> to vector<1x32xf32>
    %c0_33 = arith.constant 0 : index
    %c0_34 = arith.constant 0 : index
    %c0_35 = arith.constant 0 : index
    %73 = vector.load %arg10[%c0_33, %c0_34, %c0_35] : memref<1x1x32xf32, #tpu.memory_space<vmem>>, vector<1x1x32xf32>
    %74 = vector.shape_cast %73 : vector<1x1x32xf32> to vector<1x32xf32>
    %cst_36 = arith.constant dense<0.000000e+00> : vector<8xf32>
    %75 = vector.multi_reduction <add>, %70, %cst_36 [1] : vector<8x32xf32> to vector<8xf32>
    %76 = vector.shape_cast %75 : vector<8xf32> to vector<8x1xf32>
    %cst_37 = arith.constant 3.200000e+01 : f32
    %77 = vector.broadcast %cst_37 : f32 to vector<8x1xf32>
    %78 = arith.divf %76, %77 : vector<8x1xf32>
    %79 = vector.broadcast %78 : vector<8x1xf32> to vector<8x32xf32>
    %80 = arith.subf %70, %79 : vector<8x32xf32>
    %81 = arith.mulf %80, %80 : vector<8x32xf32>
    %cst_38 = arith.constant dense<0.000000e+00> : vector<8xf32>
    %82 = vector.multi_reduction <add>, %81, %cst_38 [1] : vector<8x32xf32> to vector<8xf32>
    %83 = vector.shape_cast %82 : vector<8xf32> to vector<8x1xf32>
    %cst_39 = arith.constant 3.200000e+01 : f32
    %84 = vector.broadcast %cst_39 : f32 to vector<8x1xf32>
    %85 = arith.divf %83, %84 : vector<8x1xf32>
    %86 = vector.broadcast %78 : vector<8x1xf32> to vector<8x32xf32>
    %87 = arith.subf %70, %86 : vector<8x32xf32>
    %cst_40 = arith.constant 9.99999974E-6 : f32
    %88 = vector.broadcast %cst_40 : f32 to vector<8x1xf32>
    %89 = arith.addf %85, %88 : vector<8x1xf32>
    %90 = math.rsqrt %89 : vector<8x1xf32>
    %91 = vector.broadcast %90 : vector<8x1xf32> to vector<8x32xf32>
    %92 = arith.mulf %87, %91 : vector<8x32xf32>
    %93 = vector.broadcast %72 : vector<1x32xf32> to vector<8x32xf32>
    %94 = arith.mulf %92, %93 : vector<8x32xf32>
    %95 = vector.broadcast %74 : vector<1x32xf32> to vector<8x32xf32>
    %96 = arith.addf %94, %95 : vector<8x32xf32>
    %97 = arith.truncf %96 : vector<8x32xf32> to vector<8x32xbf16>
    %c0_41 = arith.constant 0 : index
    %c0_42 = arith.constant 0 : index
    %c0_43 = arith.constant 0 : index
    %98 = vector.load %arg11[%c0_41, %c0_42, %c0_43] : memref<1x32x128xbf16, #tpu.memory_space<vmem>>, vector<1x32x128xbf16>
    %99 = vector.shape_cast %98 : vector<1x32x128xbf16> to vector<32x128xbf16>
    %cst_44 = arith.constant dense<0.000000e+00> : vector<8x128xf32>
    %100 = tpu.matmul %97, %99, %cst_44 {dimension_numbers = #tpu.dot_dimension_numbers<[1], [0], [0], [1], [0, 0, 1, 1], [], []>} : vector<8x32xbf16>, vector<32x128xbf16>, vector<8x128xf32> -> vector<8x128xf32>
    %c0_45 = arith.constant 0 : index
    %c0_46 = arith.constant 0 : index
    %c0_47 = arith.constant 0 : index
    %101 = vector.load %arg12[%c0_45, %c0_46, %c0_47] : memref<1x1x128xf32, #tpu.memory_space<vmem>>, vector<1x1x128xf32>
    %102 = vector.shape_cast %101 : vector<1x1x128xf32> to vector<1x128xf32>
    %103 = vector.broadcast %102 : vector<1x128xf32> to vector<8x128xf32>
    %104 = arith.addf %100, %103 : vector<8x128xf32>
    %cst_48 = arith.constant 5.000000e-01 : f32
    %105 = vector.broadcast %cst_48 : f32 to vector<8x128xf32>
    %106 = arith.mulf %105, %104 : vector<8x128xf32>
    %cst_49 = arith.constant 0.707106769 : f32
    %107 = vector.broadcast %cst_49 : f32 to vector<8x128xf32>
    %108 = arith.mulf %104, %107 : vector<8x128xf32>
    %109 = math.erf %108 : vector<8x128xf32>
    %cst_50 = arith.constant 1.000000e+00 : f32
    %110 = vector.broadcast %cst_50 : f32 to vector<8x128xf32>
    %111 = arith.addf %110, %109 : vector<8x128xf32>
    %112 = arith.mulf %106, %111 : vector<8x128xf32>
    %113 = arith.truncf %112 : vector<8x128xf32> to vector<8x128xbf16>
    %c0_51 = arith.constant 0 : index
    %c0_52 = arith.constant 0 : index
    %c0_53 = arith.constant 0 : index
    %114 = vector.load %arg13[%c0_51, %c0_52, %c0_53] : memref<1x128x32xbf16, #tpu.memory_space<vmem>>, vector<1x128x32xbf16>
    %115 = vector.shape_cast %114 : vector<1x128x32xbf16> to vector<128x32xbf16>
    %cst_54 = arith.constant dense<0.000000e+00> : vector<8x32xf32>
    %116 = tpu.matmul %113, %115, %cst_54 {dimension_numbers = #tpu.dot_dimension_numbers<[1], [0], [0], [1], [0, 0, 1, 1], [], []>} : vector<8x128xbf16>, vector<128x32xbf16>, vector<8x32xf32> -> vector<8x32xf32>
    %c0_55 = arith.constant 0 : index
    %c0_56 = arith.constant 0 : index
    %c0_57 = arith.constant 0 : index
    %117 = vector.load %arg14[%c0_55, %c0_56, %c0_57] : memref<1x1x32xf32, #tpu.memory_space<vmem>>, vector<1x1x32xf32>
    %118 = vector.shape_cast %117 : vector<1x1x32xf32> to vector<1x32xf32>
    %119 = vector.broadcast %118 : vector<1x32xf32> to vector<8x32xf32>
    %120 = arith.addf %116, %119 : vector<8x32xf32>
    %121 = arith.addf %70, %120 : vector<8x32xf32>
    %c0_58 = arith.constant 0 : index
    %c0_59 = arith.constant 0 : index
    %122 = vector.load %arg18[%c0_58, %c0_59] : memref<8x32xf32, #tpu.memory_space<vmem>>, vector<8x32xf32>
    tpu.vector_store %arg18[%c0_58, %c0_59], %121 {strides = array<i32>} : memref<8x32xf32, #tpu.memory_space<vmem>>, vector<8x32xf32>,
    %c1_i32 = arith.constant 1 : i32
    %123 = arith.cmpi eq, %arg1, %c1_i32 : i32
    %124 = arith.extui %123 : i1 to i32
    %c0_i32_60 = arith.constant 0 : i32
    %125 = arith.cmpi ne, %124, %c0_i32_60 : i32
    scf.if %125 {
      %c0_61 = arith.constant 0 : index
      %c0_62 = arith.constant 0 : index
      %126 = vector.load %arg15[%c0_61, %c0_62] : memref<1x32xf32, #tpu.memory_space<vmem>>, vector<1x32xf32>
      %c0_63 = arith.constant 0 : index
      %c0_64 = arith.constant 0 : index
      %127 = vector.load %arg16[%c0_63, %c0_64] : memref<1x32xf32, #tpu.memory_space<vmem>>, vector<1x32xf32>
      %cst_65 = arith.constant dense<0.000000e+00> : vector<8xf32>
      %128 = vector.multi_reduction <add>, %121, %cst_65 [1] : vector<8x32xf32> to vector<8xf32>
      %129 = vector.shape_cast %128 : vector<8xf32> to vector<8x1xf32>
      %cst_66 = arith.constant 3.200000e+01 : f32
      %130 = vector.broadcast %cst_66 : f32 to vector<8x1xf32>
      %131 = arith.divf %129, %130 : vector<8x1xf32>
      %132 = vector.broadcast %131 : vector<8x1xf32> to vector<8x32xf32>
      %133 = arith.subf %121, %132 : vector<8x32xf32>
      %134 = arith.mulf %133, %133 : vector<8x32xf32>
      %cst_67 = arith.constant dense<0.000000e+00> : vector<8xf32>
      %135 = vector.multi_reduction <add>, %134, %cst_67 [1] : vector<8x32xf32> to vector<8xf32>
      %136 = vector.shape_cast %135 : vector<8xf32> to vector<8x1xf32>
      %cst_68 = arith.constant 3.200000e+01 : f32
      %137 = vector.broadcast %cst_68 : f32 to vector<8x1xf32>
      %138 = arith.divf %136, %137 : vector<8x1xf32>
      %139 = vector.broadcast %131 : vector<8x1xf32> to vector<8x32xf32>
      %140 = arith.subf %121, %139 : vector<8x32xf32>
      %cst_69 = arith.constant 9.99999974E-6 : f32
      %141 = vector.broadcast %cst_69 : f32 to vector<8x1xf32>
      %142 = arith.addf %138, %141 : vector<8x1xf32>
      %143 = math.rsqrt %142 : vector<8x1xf32>
      %144 = vector.broadcast %143 : vector<8x1xf32> to vector<8x32xf32>
      %145 = arith.mulf %140, %144 : vector<8x32xf32>
      %146 = vector.broadcast %126 : vector<1x32xf32> to vector<8x32xf32>
      %147 = arith.mulf %145, %146 : vector<8x32xf32>
      %148 = vector.broadcast %127 : vector<1x32xf32> to vector<8x32xf32>
      %149 = arith.addf %147, %148 : vector<8x32xf32>
      %c0_70 = arith.constant 0 : index
      %c0_71 = arith.constant 0 : index
      %150 = vector.load %arg17[%c0_70, %c0_71] : memref<8x32xf32, #tpu.memory_space<vmem>>, vector<8x32xf32>
      tpu.vector_store %arg17[%c0_70, %c0_71], %149 {strides = array<i32>} : memref<8x32xf32, #tpu.memory_space<vmem>>, vector<8x32xf32>,
    } else {
    }
    return
  }
  func.func @transform_0(%arg0: i32, %arg1: i32) -> (i32, i32) {
    %c0_i32 = arith.constant 0 : i32
    %c0_i32_0 = arith.constant 0 : i32
    return %arg0, %c0_i32 : i32, i32
  }
  func.func @transform_1(%arg0: i32, %arg1: i32) -> (i32, i32, i32) {
    %c0_i32 = arith.constant 0 : i32
    %c0_i32_0 = arith.constant 0 : i32
    %c0_i32_1 = arith.constant 0 : i32
    return %arg1, %c0_i32, %c0_i32_0 : i32, i32, i32
  }
  func.func @transform_2(%arg0: i32, %arg1: i32) -> (i32, i32, i32) {
    %c0_i32 = arith.constant 0 : i32
    %c0_i32_0 = arith.constant 0 : i32
    %c0_i32_1 = arith.constant 0 : i32
    return %arg1, %c0_i32, %c0_i32_0 : i32, i32, i32
  }
  func.func @transform_3(%arg0: i32, %arg1: i32) -> (i32, i32, i32) {
    %c0_i32 = arith.constant 0 : i32
    %c0_i32_0 = arith.constant 0 : i32
    %c0_i32_1 = arith.constant 0 : i32
    return %arg1, %c0_i32, %c0_i32_0 : i32, i32, i32
  }
  func.func @transform_4(%arg0: i32, %arg1: i32) -> (i32, i32, i32) {
    %c0_i32 = arith.constant 0 : i32
    %c0_i32_0 = arith.constant 0 : i32
    %c0_i32_1 = arith.constant 0 : i32
    return %arg1, %c0_i32, %c0_i32_0 : i32, i32, i32
  }
  func.func @transform_5(%arg0: i32, %arg1: i32) -> (i32, i32, i32) {
    %c0_i32 = arith.constant 0 : i32
    %c0_i32_0 = arith.constant 0 : i32
    %c0_i32_1 = arith.constant 0 : i32
    return %arg1, %c0_i32, %c0_i32_0 : i32, i32, i32
  }
  func.func @transform_6(%arg0: i32, %arg1: i32) -> (i32, i32, i32) {
    %c0_i32 = arith.constant 0 : i32
    %c0_i32_0 = arith.constant 0 : i32
    %c0_i32_1 = arith.constant 0 : i32
    return %arg1, %c0_i32, %c0_i32_0 : i32, i32, i32
  }
  func.func @transform_7(%arg0: i32, %arg1: i32) -> (i32, i32, i32) {
    %c0_i32 = arith.constant 0 : i32
    %c0_i32_0 = arith.constant 0 : i32
    %c0_i32_1 = arith.constant 0 : i32
    return %arg1, %c0_i32, %c0_i32_0 : i32, i32, i32
  }
  func.func @transform_8(%arg0: i32, %arg1: i32) -> (i32, i32, i32) {
    %c0_i32 = arith.constant 0 : i32
    %c0_i32_0 = arith.constant 0 : i32
    %c0_i32_1 = arith.constant 0 : i32
    return %arg1, %c0_i32, %c0_i32_0 : i32, i32, i32
  }
  func.func @transform_9(%arg0: i32, %arg1: i32) -> (i32, i32, i32) {
    %c0_i32 = arith.constant 0 : i32
    %c0_i32_0 = arith.constant 0 : i32
    %c0_i32_1 = arith.constant 0 : i32
    return %arg1, %c0_i32, %c0_i32_0 : i32, i32, i32
  }
  func.func @transform_10(%arg0: i32, %arg1: i32) -> (i32, i32, i32) {
    %c0_i32 = arith.constant 0 : i32
    %c0_i32_0 = arith.constant 0 : i32
    %c0_i32_1 = arith.constant 0 : i32
    return %arg1, %c0_i32, %c0_i32_0 : i32, i32, i32
  }
  func.func @transform_11(%arg0: i32, %arg1: i32) -> (i32, i32, i32) {
    %c0_i32 = arith.constant 0 : i32
    %c0_i32_0 = arith.constant 0 : i32
    %c0_i32_1 = arith.constant 0 : i32
    return %arg1, %c0_i32, %c0_i32_0 : i32, i32, i32
  }
  func.func @transform_12(%arg0: i32, %arg1: i32) -> (i32, i32, i32) {
    %c0_i32 = arith.constant 0 : i32
    %c0_i32_0 = arith.constant 0 : i32
    %c0_i32_1 = arith.constant 0 : i32
    return %arg1, %c0_i32, %c0_i32_0 : i32, i32, i32
  }
  func.func @transform_13(%arg0: i32, %arg1: i32) -> (i32, i32) {
    %c0_i32 = arith.constant 0 : i32
    %c0_i32_0 = arith.constant 0 : i32
    %c0_i32_1 = arith.constant 0 : i32
    return %c0_i32, %c0_i32_0 : i32, i32
  }
  func.func @transform_14(%arg0: i32, %arg1: i32) -> (i32, i32) {
    %c0_i32 = arith.constant 0 : i32
    %c0_i32_0 = arith.constant 0 : i32
    %c0_i32_1 = arith.constant 0 : i32
    return %c0_i32, %c0_i32_0 : i32, i32
  }
  func.func @transform_15(%arg0: i32, %arg1: i32) -> (i32, i32) {
    %c0_i32 = arith.constant 0 : i32
    %c0_i32_0 = arith.constant 0 : i32
    return %arg0, %c0_i32 : i32, i32
  }
}

</mosaic_0001>

<llo_original>
// kernel: _lambda_.1
$region0: #{_lambda_.1}
  #allocation0 [shape = 'u32[]', space=smem, size = 0x4, offset = 0x4, fixed_abs, tag = 'smem constant byte address 0x4 - core index']
  #allocation1 [shape = 'u32[144,128]{1,0:T(1,128)}', space=vmem, size = 0x12000, scoped, tag = 'internal scratch']
  #allocation2 [shape = 'f32[8,32]{1,0:T(8,128)}', space=vmem, size = 0x1000, scoped, tag = 'scratch operand']
  %s0 = inlined_call_operand.vmem [shape: f32[16,32], index: 0, kind: input, shape index: {}]
  %s1 = inlined_call_operand.vmem [shape: f32[2,1,32], index: 1, kind: input, shape index: {}]
  %s2 = inlined_call_operand.vmem [shape: f32[2,1,32], index: 2, kind: input, shape index: {}]
  %s3 = inlined_call_operand.vmem [shape: bf16[2,32,96], index: 3, kind: input, shape index: {}]
  %s4 = inlined_call_operand.vmem [shape: f32[2,1,96], index: 4, kind: input, shape index: {}]
  %s5 = inlined_call_operand.vmem [shape: bf16[2,32,32], index: 5, kind: input, shape index: {}]
  %s6 = inlined_call_operand.vmem [shape: f32[2,1,32], index: 6, kind: input, shape index: {}]
  %s7 = inlined_call_operand.vmem [shape: f32[2,1,32], index: 7, kind: input, shape index: {}]
  %s8 = inlined_call_operand.vmem [shape: f32[2,1,32], index: 8, kind: input, shape index: {}]
  %s9 = inlined_call_operand.vmem [shape: bf16[2,32,128], index: 9, kind: input, shape index: {}]
  %s10 = inlined_call_operand.vmem [shape: f32[2,1,128], index: 10, kind: input, shape index: {}]
  %s11 = inlined_call_operand.vmem [shape: bf16[2,128,32], index: 11, kind: input, shape index: {}]
  %s12 = inlined_call_operand.vmem [shape: f32[2,1,32], index: 12, kind: input, shape index: {}]
  %s13 = inlined_call_operand.vmem [shape: f32[1,32], index: 13, kind: input, shape index: {}]
  %s14 = inlined_call_operand.vmem [shape: f32[1,32], index: 14, kind: input, shape index: {}]
  %s15 = inlined_call_operand.hbm [shape: f32[16,32], index: 15, kind: output, shape index: {}]
  %s16 = sld [smem:[#allocation0]]
  $region101: #{_lambda_.1} parent=0
    _
  %s18 = ssub.s32 1, %s16
  %s19 = scalar_select 0, %s18, %s16
  $region1: #{_lambda_.1} parent=0
    #allocation3 [shape = 'u8[8192]{0}', space=vmem, size = 0x2000, scoped, tag = 'output window, operand 0']
    #allocation4 [shape = 's32[2]{0}', space=sflag, size = 0x8, scoped, tag = 'scoped memory for _lambda_.1']
    %20 = vsyncpa [#allocation4], 0
    %s21 = scalar_lea.sflag [#allocation4], 1
    %22 = vsyncpa %s21, 0
    loop: start=0, step=1, limit=6
    $region2: #{_lambda_.1} parent=1 // loop_pre_header
      _
    $region3: #{_lambda_.1} parent=1 // loop_header
      %s24 = sphi 0, %s28
      %p25 = scmp.ge.s32.totalorder %s24, 6
      %s31 = sphi 0, %s43
      %s32 = sphi 0, %s39
      %s33 = sphi 0, %s31
      %s34 = sphi 0, %s32
      %s35 = sphi 0, %s33
      %s36 = sphi 0, %s34
      %s46 = sphi 0, %s48
      %s49 = sphi 0, %s46
      %s50 = sphi 0, %s49
      %s66 = sphi 0, %s50
      %s72 = sphi 0, %s74
      %s75 = sphi 0, %s72
      %s76 = sphi 0, %s75
      %s92 = sphi 0, %s76
      %s98 = sphi 0, %s100
      %s101 = sphi 0, %s98
      %s102 = sphi 0, %s101
      %s118 = sphi 0, %s102
      %s124 = sphi 0, %s126
      %s127 = sphi 0, %s124
      %s128 = sphi 0, %s127
      %s144 = sphi 0, %s128
      %s150 = sphi 0, %s152
      %s153 = sphi 0, %s150
      %s154 = sphi 0, %s153
      %s170 = sphi 0, %s154
      %s176 = sphi 0, %s178
      %s179 = sphi 0, %s176
      %s180 = sphi 0, %s179
      %s196 = sphi 0, %s180
      %s202 = sphi 0, %s204
      %s205 = sphi 0, %s202
      %s206 = sphi 0, %s205
      %s222 = sphi 0, %s206
      %s228 = sphi 0, %s230
      %s231 = sphi 0, %s228
      %s232 = sphi 0, %s231
      %s248 = sphi 0, %s232
      %s254 = sphi 0, %s256
      %s257 = sphi 0, %s254
      %s258 = sphi 0, %s257
      %s274 = sphi 0, %s258
      %s280 = sphi 0, %s282
      %s283 = sphi 0, %s280
      %s284 = sphi 0, %s283
      %s300 = sphi 0, %s284
      %s306 = sphi 0, %s308
      %s309 = sphi 0, %s306
      %s310 = sphi 0, %s309
      %s326 = sphi 0, %s310
      %s332 = sphi 0, %s334
      %s335 = sphi 0, %s332
      %s336 = sphi 0, %s335
      %s352 = sphi 0, %s336
      %s358 = sphi 0, %s360
      %s361 = sphi 0, %s358
      %s362 = sphi 0, %s361
      %s378 = sphi 0, %s362
      %s382 = sphi 0, %s382
      %s384 = sphi 0, %s382
      %s385 = sphi 0, %s384
      %s399 = sphi 0, %s385
      %s403 = sphi 0, %s403
      %s405 = sphi 0, %s403
      %s406 = sphi 0, %s405
      %s420 = sphi 0, %s406
      %s426 = sphi 0, %s428
      %s429 = sphi 0, %s426
      %s430 = sphi 0, %s429
      %s446 = sphi 0, %s430
    $region4: #{_lambda_.1} parent=1 // loop_header_branch
      %27 = sbr.rel (%p25) target = $region8
    $region5: #{_lambda_.1} parent=1 // loop_body
      %s29 = ssub.s32 %s24, 1
      %s30 = ssub.s32 %s24, 2
      %s37 = sadd.s32 1, %s32
      %p38 = scmp.ge.s32.totalorder %s37, 2
      %s39 = scalar_select %p38, 0, %s37
      %s40 = sadd.s32 1, %s31
      %s41 = scalar_select %p38, %s40, %s31
      %p42 = scmp.ge.s32.totalorder %s41, 2
      %s43 = scalar_select %p42, 0, %s41
      %s44 = ssub.s32 %s31, %s43
      %p45 = scmp.eq.s32.totalorder %s44, 0
      %s47 = sadd.s32 %s46, 1
      %s48 = scalar_select %p45, %s46, %s47
      %p51 = pneg %p45
      %p52 = scmp.eq.s32.totalorder %s24, 3
      %p53 = por %p51, %p52
      %p54 = scmp.ne.s32.totalorder %s46, %s49
      %p55 = scmp.eq.s32.totalorder %s24, 0
      %p56 = por %p54, %p55
      %p57 = scmp.ne.s32.totalorder %s46, %s49
      %p58 = scmp.eq.s32.totalorder %s29, 3
      %p59 = por %p57, %p58
      %p60 = scmp.ne.s32.totalorder %s49, %s50
      %p61 = scmp.eq.s32.totalorder %s29, 0
      %p62 = por %p60, %p61
      %p63 = scmp.ne.s32.totalorder %s49, %s50
      %p64 = scmp.eq.s32.totalorder %s30, 3
      %p65 = por %p63, %p64
      %p67 = scmp.ne.s32.totalorder %s50, %s66
      %p68 = scmp.eq.s32.totalorder %s30, 0
      %p69 = por %p67, %p68
      %s70 = ssub.s32 %s32, %s39
      %p71 = scmp.eq.s32.totalorder %s70, 0
      %s73 = sadd.s32 %s72, 1
      %s74 = scalar_select %p71, %s72, %s73
      %p77 = pneg %p71
      %p78 = scmp.eq.s32.totalorder %s24, 3
      %p79 = por %p77, %p78
      %p80 = scmp.ne.s32.totalorder %s72, %s75
      %p81 = scmp.eq.s32.totalorder %s24, 0
      %p82 = por %p80, %p81
      %p83 = scmp.ne.s32.totalorder %s72, %s75
      %p84 = scmp.eq.s32.totalorder %s29, 3
      %p85 = por %p83, %p84
      %p86 = scmp.ne.s32.totalorder %s75, %s76
      %p87 = scmp.eq.s32.totalorder %s29, 0
      %p88 = por %p86, %p87
      %p89 = scmp.ne.s32.totalorder %s75, %s76
      %p90 = scmp.eq.s32.totalorder %s30, 3
      %p91 = por %p89, %p90
      %p93 = scmp.ne.s32.totalorder %s76, %s92
      %p94 = scmp.eq.s32.totalorder %s30, 0
      %p95 = por %p93, %p94
      %s96 = ssub.s32 %s32, %s39
      %p97 = scmp.eq.s32.totalorder %s96, 0
      %s99 = sadd.s32 %s98, 1
      %s100 = scalar_select %p97, %s98, %s99
      %p103 = pneg %p97
      %p104 = scmp.eq.s32.totalorder %s24, 3
      %p105 = por %p103, %p104
      %p106 = scmp.ne.s32.totalorder %s98, %s101
      %p107 = scmp.eq.s32.totalorder %s24, 0
      %p108 = por %p106, %p107
      %p109 = scmp.ne.s32.totalorder %s98, %s101
      %p110 = scmp.eq.s32.totalorder %s29, 3
      %p111 = por %p109, %p110
      %p112 = scmp.ne.s32.totalorder %s101, %s102
      %p113 = scmp.eq.s32.totalorder %s29, 0
      %p114 = por %p112, %p113
      %p115 = scmp.ne.s32.totalorder %s101, %s102
      %p116 = scmp.eq.s32.totalorder %s30, 3
      %p117 = por %p115, %p116
      %p119 = scmp.ne.s32.totalorder %s102, %s118
      %p120 = scmp.eq.s32.totalorder %s30, 0
      %p121 = por %p119, %p120
      %s122 = ssub.s32 %s32, %s39
      %p123 = scmp.eq.s32.totalorder %s122, 0
      %s125 = sadd.s32 %s124, 1
      %s126 = scalar_select %p123, %s124, %s125
      %p129 = pneg %p123
      %p130 = scmp.eq.s32.totalorder %s24, 3
      %p131 = por %p129, %p130
      %p132 = scmp.ne.s32.totalorder %s124, %s127
      %p133 = scmp.eq.s32.totalorder %s24, 0
      %p134 = por %p132, %p133
      %p135 = scmp.ne.s32.totalorder %s124, %s127
      %p136 = scmp.eq.s32.totalorder %s29, 3
      %p137 = por %p135, %p136
      %p138 = scmp.ne.s32.totalorder %s127, %s128
      %p139 = scmp.eq.s32.totalorder %s29, 0
      %p140 = por %p138, %p139
      %p141 = scmp.ne.s32.totalorder %s127, %s128
      %p142 = scmp.eq.s32.totalorder %s30, 3
      %p143 = por %p141, %p142
      %p145 = scmp.ne.s32.totalorder %s128, %s144
      %p146 = scmp.eq.s32.totalorder %s30, 0
      %p147 = por %p145, %p146
      %s148 = ssub.s32 %s32, %s39
      %p149 = scmp.eq.s32.totalorder %s148, 0
      %s151 = sadd.s32 %s150, 1
      %s152 = scalar_select %p149, %s150, %s151
      %p155 = pneg %p149
      %p156 = scmp.eq.s32.totalorder %s24, 3
      %p157 = por %p155, %p156
      %p158 = scmp.ne.s32.totalorder %s150, %s153
      %p159 = scmp.eq.s32.totalorder %s24, 0
      %p160 = por %p158, %p159
      %p161 = scmp.ne.s32.totalorder %s150, %s153
      %p162 = scmp.eq.s32.totalorder %s29, 3
      %p163 = por %p161, %p162
      %p164 = scmp.ne.s32.totalorder %s153, %s154
      %p165 = scmp.eq.s32.totalorder %s29, 0
      %p166 = por %p164, %p165
      %p167 = scmp.ne.s32.totalorder %s153, %s154
      %p168 = scmp.eq.s32.totalorder %s30, 3
      %p169 = por %p167, %p168
      %p171 = scmp.ne.s32.totalorder %s154, %s170
      %p172 = scmp.eq.s32.totalorder %s30, 0
      %p173 = por %p171, %p172
      %s174 = ssub.s32 %s32, %s39
      %p175 = scmp.eq.s32.totalorder %s174, 0
      %s177 = sadd.s32 %s176, 1
      %s178 = scalar_select %p175, %s176, %s177
      %p181 = pneg %p175
      %p182 = scmp.eq.s32.totalorder %s24, 3
      %p183 = por %p181, %p182
      %p184 = scmp.ne.s32.totalorder %s176, %s179
      %p185 = scmp.eq.s32.totalorder %s24, 0
      %p186 = por %p184, %p185
      %p187 = scmp.ne.s32.totalorder %s176, %s179
      %p188 = scmp.eq.s32.totalorder %s29, 3
      %p189 = por %p187, %p188
      %p190 = scmp.ne.s32.totalorder %s179, %s180
      %p191 = scmp.eq.s32.totalorder %s29, 0
      %p192 = por %p190, %p191
      %p193 = scmp.ne.s32.totalorder %s179, %s180
      %p194 = scmp.eq.s32.totalorder %s30, 3
      %p195 = por %p193, %p194
      %p197 = scmp.ne.s32.totalorder %s180, %s196
      %p198 = scmp.eq.s32.totalorder %s30, 0
      %p199 = por %p197, %p198
      %s200 = ssub.s32 %s32, %s39
      %p201 = scmp.eq.s32.totalorder %s200, 0
      %s203 = sadd.s32 %s202, 1
      %s204 = scalar_select %p201, %s202, %s203
      %p207 = pneg %p201
      %p208 = scmp.eq.s32.totalorder %s24, 3
      %p209 = por %p207, %p208
      %p210 = scmp.ne.s32.totalorder %s202, %s205
      %p211 = scmp.eq.s32.totalorder %s24, 0
      %p212 = por %p210, %p211
      %p213 = scmp.ne.s32.totalorder %s202, %s205
      %p214 = scmp.eq.s32.totalorder %s29, 3
      %p215 = por %p213, %p214
      %p216 = scmp.ne.s32.totalorder %s205, %s206
      %p217 = scmp.eq.s32.totalorder %s29, 0
      %p218 = por %p216, %p217
      %p219 = scmp.ne.s32.totalorder %s205, %s206
      %p220 = scmp.eq.s32.totalorder %s30, 3
      %p221 = por %p219, %p220
      %p223 = scmp.ne.s32.totalorder %s206, %s222
      %p224 = scmp.eq.s32.totalorder %s30, 0
      %p225 = por %p223, %p224
      %s226 = ssub.s32 %s32, %s39
      %p227 = scmp.eq.s32.totalorder %s226, 0
      %s229 = sadd.s32 %s228, 1
      %s230 = scalar_select %p227, %s228, %s229
      %p233 = pneg %p227
      %p234 = scmp.eq.s32.totalorder %s24, 3
      %p235 = por %p233, %p234
      %p236 = scmp.ne.s32.totalorder %s228, %s231
      %p237 = scmp.eq.s32.totalorder %s24, 0
      %p238 = por %p236, %p237
      %p239 = scmp.ne.s32.totalorder %s228, %s231
      %p240 = scmp.eq.s32.totalorder %s29, 3
      %p241 = por %p239, %p240
      %p242 = scmp.ne.s32.totalorder %s231, %s232
      %p243 = scmp.eq.s32.totalorder %s29, 0
      %p244 = por %p242, %p243
      %p245 = scmp.ne.s32.totalorder %s231, %s232
      %p246 = scmp.eq.s32.totalorder %s30, 3
      %p247 = por %p245, %p246
      %p249 = scmp.ne.s32.totalorder %s232, %s248
      %p250 = scmp.eq.s32.totalorder %s30, 0
      %p251 = por %p249, %p250
      %s252 = ssub.s32 %s32, %s39
      %p253 = scmp.eq.s32.totalorder %s252, 0
      %s255 = sadd.s32 %s254, 1
      %s256 = scalar_select %p253, %s254, %s255
      %p259 = pneg %p253
      %p260 = scmp.eq.s32.totalorder %s24, 3
      %p261 = por %p259, %p260
      %p262 = scmp.ne.s32.totalorder %s254, %s257
      %p263 = scmp.eq.s32.totalorder %s24, 0
      %p264 = por %p262, %p263
      %p265 = scmp.ne.s32.totalorder %s254, %s257
      %p266 = scmp.eq.s32.totalorder %s29, 3
      %p267 = por %p265, %p266
      %p268 = scmp.ne.s32.totalorder %s257, %s258
      %p269 = scmp.eq.s32.totalorder %s29, 0
      %p270 = por %p268, %p269
      %p271 = scmp.ne.s32.totalorder %s257, %s258
      %p272 = scmp.eq.s32.totalorder %s30, 3
      %p273 = por %p271, %p272
      %p275 = scmp.ne.s32.totalorder %s258, %s274
      %p276 = scmp.eq.s32.totalorder %s30, 0
      %p277 = por %p275, %p276
      %s278 = ssub.s32 %s32, %s39
      %p279 = scmp.eq.s32.totalorder %s278, 0
      %s281 = sadd.s32 %s280, 1
      %s282 = scalar_select %p279, %s280, %s281
      %p285 = pneg %p279
      %p286 = scmp.eq.s32.totalorder %s24, 3
      %p287 = por %p285, %p286
      %p288 = scmp.ne.s32.totalorder %s280, %s283
      %p289 = scmp.eq.s32.totalorder %s24, 0
      %p290 = por %p288, %p289
      %p291 = scmp.ne.s32.totalorder %s280, %s283
      %p292 = scmp.eq.s32.totalorder %s29, 3
      %p293 = por %p291, %p292
      %p294 = scmp.ne.s32.totalorder %s283, %s284
      %p295 = scmp.eq.s32.totalorder %s29, 0
      %p296 = por %p294, %p295
      %p297 = scmp.ne.s32.totalorder %s283, %s284
      %p298 = scmp.eq.s32.totalorder %s30, 3
      %p299 = por %p297, %p298
      %p301 = scmp.ne.s32.totalorder %s284, %s300
      %p302 = scmp.eq.s32.totalorder %s30, 0
      %p303 = por %p301, %p302
      %s304 = ssub.s32 %s32, %s39
      %p305 = scmp.eq.s32.totalorder %s304, 0
      %s307 = sadd.s32 %s306, 1
      %s308 = scalar_select %p305, %s306, %s307
      %p311 = pneg %p305
      %p312 = scmp.eq.s32.totalorder %s24, 3
      %p313 = por %p311, %p312
      %p314 = scmp.ne.s32.totalorder %s306, %s309
      %p315 = scmp.eq.s32.totalorder %s24, 0
      %p316 = por %p314, %p315
      %p317 = scmp.ne.s32.totalorder %s306, %s309
      %p318 = scmp.eq.s32.totalorder %s29, 3
      %p319 = por %p317, %p318
      %p320 = scmp.ne.s32.totalorder %s309, %s310
      %p321 = scmp.eq.s32.totalorder %s29, 0
      %p322 = por %p320, %p321
      %p323 = scmp.ne.s32.totalorder %s309, %s310
      %p324 = scmp.eq.s32.totalorder %s30, 3
      %p325 = por %p323, %p324
      %p327 = scmp.ne.s32.totalorder %s310, %s326
      %p328 = scmp.eq.s32.totalorder %s30, 0
      %p329 = por %p327, %p328
      %s330 = ssub.s32 %s32, %s39
      %p331 = scmp.eq.s32.totalorder %s330, 0
      %s333 = sadd.s32 %s332, 1
      %s334 = scalar_select %p331, %s332, %s333
      %p337 = pneg %p331
      %p338 = scmp.eq.s32.totalorder %s24, 3
      %p339 = por %p337, %p338
      %p340 = scmp.ne.s32.totalorder %s332, %s335
      %p341 = scmp.eq.s32.totalorder %s24, 0
      %p342 = por %p340, %p341
      %p343 = scmp.ne.s32.totalorder %s332, %s335
      %p344 = scmp.eq.s32.totalorder %s29, 3
      %p345 = por %p343, %p344
      %p346 = scmp.ne.s32.totalorder %s335, %s336
      %p347 = scmp.eq.s32.totalorder %s29, 0
      %p348 = por %p346, %p347
      %p349 = scmp.ne.s32.totalorder %s335, %s336
      %p350 = scmp.eq.s32.totalorder %s30, 3
      %p351 = por %p349, %p350
      %p353 = scmp.ne.s32.totalorder %s336, %s352
      %p354 = scmp.eq.s32.totalorder %s30, 0
      %p355 = por %p353, %p354
      %s356 = ssub.s32 %s32, %s39
      %p357 = scmp.eq.s32.totalorder %s356, 0
      %s359 = sadd.s32 %s358, 1
      %s360 = scalar_select %p357, %s358, %s359
      %p363 = pneg %p357
      %p364 = scmp.eq.s32.totalorder %s24, 3
      %p365 = por %p363, %p364
      %p366 = scmp.ne.s32.totalorder %s358, %s361
      %p367 = scmp.eq.s32.totalorder %s24, 0
      %p368 = por %p366, %p367
      %p369 = scmp.ne.s32.totalorder %s358, %s361
      %p370 = scmp.eq.s32.totalorder %s29, 3
      %p371 = por %p369, %p370
      %p372 = scmp.ne.s32.totalorder %s361, %s362
      %p373 = scmp.eq.s32.totalorder %s29, 0
      %p374 = por %p372, %p373
      %p375 = scmp.ne.s32.totalorder %s361, %s362
      %p376 = scmp.eq.s32.totalorder %s30, 3
      %p377 = por %p375, %p376
      %p379 = scmp.ne.s32.totalorder %s362, %s378
      %p380 = scmp.eq.s32.totalorder %s30, 0
      %p381 = por %p379, %p380
      %s383 = sadd.s32 %s382, 1
      %p386 = scmp.eq.s32.totalorder %s24, 3
      %p387 = scmp.ne.s32.totalorder %s382, %s384
      %p388 = scmp.eq.s32.totalorder %s24, 0
      %p389 = por %p387, %p388
      %p390 = scmp.ne.s32.totalorder %s382, %s384
      %p391 = scmp.eq.s32.totalorder %s29, 3
      %p392 = por %p390, %p391
      %p393 = scmp.ne.s32.totalorder %s384, %s385
      %p394 = scmp.eq.s32.totalorder %s29, 0
      %p395 = por %p393, %p394
      %p396 = scmp.ne.s32.totalorder %s384, %s385
      %p397 = scmp.eq.s32.totalorder %s30, 3
      %p398 = por %p396, %p397
      %p400 = scmp.ne.s32.totalorder %s385, %s399
      %p401 = scmp.eq.s32.totalorder %s30, 0
      %p402 = por %p400, %p401
      %s404 = sadd.s32 %s403, 1
      %p407 = scmp.eq.s32.totalorder %s24, 3
      %p408 = scmp.ne.s32.totalorder %s403, %s405
      %p409 = scmp.eq.s32.totalorder %s24, 0
      %p410 = por %p408, %p409
      %p411 = scmp.ne.s32.totalorder %s403, %s405
      %p412 = scmp.eq.s32.totalorder %s29, 3
      %p413 = por %p411, %p412
      %p414 = scmp.ne.s32.totalorder %s405, %s406
      %p415 = scmp.eq.s32.totalorder %s29, 0
      %p416 = por %p414, %p415
      %p417 = scmp.ne.s32.totalorder %s405, %s406
      %p418 = scmp.eq.s32.totalorder %s30, 3
      %p419 = por %p417, %p418
      %p421 = scmp.ne.s32.totalorder %s406, %s420
      %p422 = scmp.eq.s32.totalorder %s30, 0
      %p423 = por %p421, %p422
      %s424 = ssub.s32 %s31, %s43
      %p425 = scmp.eq.s32.totalorder %s424, 0
      %s427 = sadd.s32 %s426, 1
      %s428 = scalar_select %p425, %s426, %s427
      %p431 = pneg %p425
      %p432 = scmp.eq.s32.totalorder %s24, 3
      %p433 = por %p431, %p432
      %p434 = scmp.ne.s32.totalorder %s426, %s429
      %p435 = scmp.eq.s32.totalorder %s24, 0
      %p436 = por %p434, %p435
      %p437 = scmp.ne.s32.totalorder %s426, %s429
      %p438 = scmp.eq.s32.totalorder %s29, 3
      %p439 = por %p437, %p438
      %p440 = scmp.ne.s32.totalorder %s429, %s430
      %p441 = scmp.eq.s32.totalorder %s29, 0
      %p442 = por %p440, %p441
      %p443 = scmp.ne.s32.totalorder %s429, %s430
      %p444 = scmp.eq.s32.totalorder %s30, 3
      %p445 = por %p443, %p444
      %p447 = scmp.ne.s32.totalorder %s430, %s446
      %p448 = scmp.eq.s32.totalorder %s30, 0
      %p449 = por %p447, %p448
      %p450 = scmp.le.s32.totalorder 1, %s24
      %p451 = scmp.lt.s32.totalorder %s24, 5
      %p452 = pnand %p450, %p451
      %p453 = pneg %p452
      // Predicated region
      $region9: #{_lambda_.1} parent=5 // pred_check
        _
      $region10: #{_lambda_.1} parent=5 // pred_check_branch
        %455 = sbr.rel (%p452) target = $region12
      $region11: #{_lambda_.1} parent=5 // pred_region
        %s456 = ssub.s32 %s24, 1
        // Predicated region
        $region13: #{_lambda_.1} parent=11 // pred_check
          %p457 = pneg %p395
        $region14: #{_lambda_.1} parent=11 // pred_check_branch
          %459 = sbr.rel (%p457) target = $region16
        $region15: #{_lambda_.1} parent=11 // pred_region
          _
        $region16: #{_lambda_.1} parent=11 // pred_fallthru
          _
        // Predicated region
        $region17: #{_lambda_.1} parent=11 // pred_check
          %p460 = pneg %p416
        $region18: #{_lambda_.1} parent=11 // pred_check_branch
          %462 = sbr.rel (%p460) target = $region20
        $region19: #{_lambda_.1} parent=11 // pred_region
          _
        $region20: #{_lambda_.1} parent=11 // pred_fallthru
          _
      $region12: #{_lambda_.1} parent=5 // pred_fallthru
        _
      %p463 = scmp.lt.s32.totalorder %s24, 4
      // Predicated region
      $region21: #{_lambda_.1} parent=5 // pred_check
        %p464 = pneg %p463
      $region22: #{_lambda_.1} parent=5 // pred_check_branch
        %466 = sbr.rel (%p464) target = $region24
      $region23: #{_lambda_.1} parent=5 // pred_region
        // Predicated region
        $region25: #{_lambda_.1} parent=23 // pred_check
          %p467 = pneg %p56
        $region26: #{_lambda_.1} parent=23 // pred_check_branch
          %469 = sbr.rel (%p467) target = $region28
        $region27: #{_lambda_.1} parent=23 // pred_region
          %p470 = scmp.lt.s32.totalorder %s31, 1
          %s471 = scalar_select %p470, %s31, 1
          %s472 = smul.addr %s471, 8
          %s473 = scalar_lea.vmem %s0, %s472
        $region28: #{_lambda_.1} parent=23 // pred_fallthru
          _
        // Predicated region
        $region29: #{_lambda_.1} parent=23 // pred_check
          %p474 = pneg %p82
        $region30: #{_lambda_.1} parent=23 // pred_check_branch
          %476 = sbr.rel (%p474) target = $region32
        $region31: #{_lambda_.1} parent=23 // pred_region
          %p477 = scmp.lt.s32.totalorder %s32, 1
          %s478 = scalar_select %p477, %s32, 1
          %s479 = scalar_lea.vmem %s1, %s478
        $region32: #{_lambda_.1} parent=23 // pred_fallthru
          _
        // Predicated region
        $region33: #{_lambda_.1} parent=23 // pred_check
          %p480 = pneg %p108
        $region34: #{_lambda_.1} parent=23 // pred_check_branch
          %482 = sbr.rel (%p480) target = $region36
        $region35: #{_lambda_.1} parent=23 // pred_region
          %p483 = scmp.lt.s32.totalorder %s32, 1
          %s484 = scalar_select %p483, %s32, 1
          %s485 = scalar_lea.vmem %s2, %s484
        $region36: #{_lambda_.1} parent=23 // pred_fallthru
          _
        // Predicated region
        $region37: #{_lambda_.1} parent=23 // pred_check
          %p486 = pneg %p134
        $region38: #{_lambda_.1} parent=23 // pred_check_branch
          %488 = sbr.rel (%p486) target = $region40
        $region39: #{_lambda_.1} parent=23 // pred_region
          %p489 = scmp.lt.s32.totalorder %s32, 1
          %s490 = scalar_select %p489, %s32, 1
          %s491 = smul.addr %s490, 4
          %s492 = smul.addr %s491, 4
          %s493 = scalar_lea.vmem %s3, %s492
        $region40: #{_lambda_.1} parent=23 // pred_fallthru
          _
        // Predicated region
        $region41: #{_lambda_.1} parent=23 // pred_check
          %p494 = pneg %p160
        $region42: #{_lambda_.1} parent=23 // pred_check_branch
          %496 = sbr.rel (%p494) target = $region44
        $region43: #{_lambda_.1} parent=23 // pred_region
          %p497 = scmp.lt.s32.totalorder %s32, 1
          %s498 = scalar_select %p497, %s32, 1
          %s499 = scalar_lea.vmem %s4, %s498
        $region44: #{_lambda_.1} parent=23 // pred_fallthru
          _
        // Predicated region
        $region45: #{_lambda_.1} parent=23 // pred_check
          %p500 = pneg %p186
        $region46: #{_lambda_.1} parent=23 // pred_check_branch
          %502 = sbr.rel (%p500) target = $region48
        $region47: #{_lambda_.1} parent=23 // pred_region
          %p503 = scmp.lt.s32.totalorder %s32, 1
          %s504 = scalar_select %p503, %s32, 1
          %s505 = smul.addr %s504, 4
          %s506 = smul.addr %s505, 4
          %s507 = scalar_lea.vmem %s5, %s506
        $region48: #{_lambda_.1} parent=23 // pred_fallthru
          _
        // Predicated region
        $region49: #{_lambda_.1} parent=23 // pred_check
          %p508 = pneg %p212
        $region50: #{_lambda_.1} parent=23 // pred_check_branch
          %510 = sbr.rel (%p508) target = $region52
        $region51: #{_lambda_.1} parent=23 // pred_region
          %p511 = scmp.lt.s32.totalorder %s32, 1
          %s512 = scalar_select %p511, %s32, 1
          %s513 = scalar_lea.vmem %s6, %s512
        $region52: #{_lambda_.1} parent=23 // pred_fallthru
          _
        // Predicated region
        $region53: #{_lambda_.1} parent=23 // pred_check
          %p514 = pneg %p238
        $region54: #{_lambda_.1} parent=23 // pred_check_branch
          %516 = sbr.rel (%p514) target = $region56
        $region55: #{_lambda_.1} parent=23 // pred_region
          %p517 = scmp.lt.s32.totalorder %s32, 1
          %s518 = scalar_select %p517, %s32, 1
          %s519 = scalar_lea.vmem %s7, %s518
        $region56: #{_lambda_.1} parent=23 // pred_fallthru
          _
        // Predicated region
        $region57: #{_lambda_.1} parent=23 // pred_check
          %p520 = pneg %p264
        $region58: #{_lambda_.1} parent=23 // pred_check_branch
          %522 = sbr.rel (%p520) target = $region60
        $region59: #{_lambda_.1} parent=23 // pred_region
          %p523 = scmp.lt.s32.totalorder %s32, 1
          %s524 = scalar_select %p523, %s32, 1
          %s525 = scalar_lea.vmem %s8, %s524
        $region60: #{_lambda_.1} parent=23 // pred_fallthru
          _
        // Predicated region
        $region61: #{_lambda_.1} parent=23 // pred_check
          %p526 = pneg %p290
        $region62: #{_lambda_.1} parent=23 // pred_check_branch
          %528 = sbr.rel (%p526) target = $region64
        $region63: #{_lambda_.1} parent=23 // pred_region
          %p529 = scmp.lt.s32.totalorder %s32, 1
          %s530 = scalar_select %p529, %s32, 1
          %s531 = smul.addr %s530, 4
          %s532 = smul.addr %s531, 4
          %s533 = scalar_lea.vmem %s9, %s532
        $region64: #{_lambda_.1} parent=23 // pred_fallthru
          _
        // Predicated region
        $region65: #{_lambda_.1} parent=23 // pred_check
          %p534 = pneg %p316
        $region66: #{_lambda_.1} parent=23 // pred_check_branch
          %536 = sbr.rel (%p534) target = $region68
        $region67: #{_lambda_.1} parent=23 // pred_region
          %p537 = scmp.lt.s32.totalorder %s32, 1
          %s538 = scalar_select %p537, %s32, 1
          %s539 = scalar_lea.vmem %s10, %s538
        $region68: #{_lambda_.1} parent=23 // pred_fallthru
          _
        // Predicated region
        $region69: #{_lambda_.1} parent=23 // pred_check
          %p540 = pneg %p342
        $region70: #{_lambda_.1} parent=23 // pred_check_branch
          %542 = sbr.rel (%p540) target = $region72
        $region71: #{_lambda_.1} parent=23 // pred_region
          %p543 = scmp.lt.s32.totalorder %s32, 1
          %s544 = scalar_select %p543, %s32, 1
          %s545 = smul.addr %s544, 16
          %s546 = smul.addr %s545, 4
          %s547 = scalar_lea.vmem %s11, %s546
        $region72: #{_lambda_.1} parent=23 // pred_fallthru
          _
        // Predicated region
        $region73: #{_lambda_.1} parent=23 // pred_check
          %p548 = pneg %p368
        $region74: #{_lambda_.1} parent=23 // pred_check_branch
          %550 = sbr.rel (%p548) target = $region76
        $region75: #{_lambda_.1} parent=23 // pred_region
          %p551 = scmp.lt.s32.totalorder %s32, 1
          %s552 = scalar_select %p551, %s32, 1
          %s553 = scalar_lea.vmem %s12, %s552
        $region76: #{_lambda_.1} parent=23 // pred_fallthru
          _
      $region24: #{_lambda_.1} parent=5 // pred_fallthru
        _
      %p554 = scmp.le.s32.totalorder 1, %s24
      %p555 = scmp.lt.s32.totalorder %s24, 5
      %p556 = pnand %p554, %p555
      %p557 = pneg %p556
      // Predicated region
      $region77: #{_lambda_.1} parent=5 // pred_check
        _
      $region78: #{_lambda_.1} parent=5 // pred_check_branch
        %559 = sbr.rel (%p556) target = $region80
      $region79: #{_lambda_.1} parent=5 // pred_region
        %s560 = ssub.s32 %s24, 1
        %p561 = scmp.lt.s32.totalorder %s33, 1
        %s562 = scalar_select %p561, %s33, 1
        %s563 = smul.addr %s562, 8
        %s564 = scalar_lea.vmem %s0, %s563
        %p565 = pneg %p62
        %p566 = pneg %p59
        %p567 = scmp.lt.s32.totalorder %s34, 1
        %s568 = scalar_select %p567, %s34, 1
        %s569 = scalar_lea.vmem %s1, %s568
        %p570 = pneg %p88
        %p571 = pneg %p85
        %p572 = scmp.lt.s32.totalorder %s34, 1
        %s573 = scalar_select %p572, %s34, 1
        %s574 = scalar_lea.vmem %s2, %s573
        %p575 = pneg %p114
        %p576 = pneg %p111
        %p577 = scmp.lt.s32.totalorder %s34, 1
        %s578 = scalar_select %p577, %s34, 1
        %s579 = smul.addr %s578, 4
        %s580 = smul.addr %s579, 4
        %s581 = scalar_lea.vmem %s3, %s580
        %p582 = pneg %p140
        %p583 = pneg %p137
        %p584 = scmp.lt.s32.totalorder %s34, 1
        %s585 = scalar_select %p584, %s34, 1
        %s586 = scalar_lea.vmem %s4, %s585
        %p587 = pneg %p166
        %p588 = pneg %p163
        %p589 = scmp.lt.s32.totalorder %s34, 1
        %s590 = scalar_select %p589, %s34, 1
        %s591 = smul.addr %s590, 4
        %s592 = smul.addr %s591, 4
        %s593 = scalar_lea.vmem %s5, %s592
        %p594 = pneg %p192
        %p595 = pneg %p189
        %p596 = scmp.lt.s32.totalorder %s34, 1
        %s597 = scalar_select %p596, %s34, 1
        %s598 = scalar_lea.vmem %s6, %s597
        %p599 = pneg %p218
        %p600 = pneg %p215
        %p601 = scmp.lt.s32.totalorder %s34, 1
        %s602 = scalar_select %p601, %s34, 1
        %s603 = scalar_lea.vmem %s7, %s602
        %p604 = pneg %p244
        %p605 = pneg %p241
        %p606 = scmp.lt.s32.totalorder %s34, 1
        %s607 = scalar_select %p606, %s34, 1
        %s608 = scalar_lea.vmem %s8, %s607
        %p609 = pneg %p270
        %p610 = pneg %p267
        %p611 = scmp.lt.s32.totalorder %s34, 1
        %s612 = scalar_select %p611, %s34, 1
        %s613 = smul.addr %s612, 4
        %s614 = smul.addr %s613, 4
        %s615 = scalar_lea.vmem %s9, %s614
        %p616 = pneg %p296
        %p617 = pneg %p293
        %p618 = scmp.lt.s32.totalorder %s34, 1
        %s619 = scalar_select %p618, %s34, 1
        %s620 = scalar_lea.vmem %s10, %s619
        %p621 = pneg %p322
        %p622 = pneg %p319
        %p623 = scmp.lt.s32.totalorder %s34, 1
        %s624 = scalar_select %p623, %s34, 1
        %s625 = smul.addr %s624, 16
        %s626 = smul.addr %s625, 4
        %s627 = scalar_lea.vmem %s11, %s626
        %p628 = pneg %p348
        %p629 = pneg %p345
        %p630 = scmp.lt.s32.totalorder %s34, 1
        %s631 = scalar_select %p630, %s34, 1
        %s632 = scalar_lea.vmem %s12, %s631
        %p633 = pneg %p374
        %p634 = pneg %p371
        %p635 = pneg %p395
        %p636 = pneg %p392
        %p637 = pneg %p416
        %p638 = pneg %p413
        %p639 = pneg %p442
        %p640 = pneg %p439
        %s641 = sand.u32 %s429, 1
        %s642 = scalar_lea.sflag [#allocation4], %s641
        %s643 = sand.u32 %s429, 1
        %s644 = smul.addr %s643, 8
        %s645 = scalar_lea.vmem [#allocation3], %s644
        %p646 = scmp.lt.s32.totalorder %s33, 1
        %s647 = scalar_select %p646, %s33, 1
        %s648 = smul.addr %s647, 8
        %s649 = scalar_lea.vmem %s0, %s648
        %p650 = scmp.lt.s32.totalorder %s34, 1
        %s651 = scalar_select %p650, %s34, 1
        %s652 = scalar_lea.vmem %s1, %s651
        %p653 = scmp.lt.s32.totalorder %s34, 1
        %s654 = scalar_select %p653, %s34, 1
        %s655 = scalar_lea.vmem %s2, %s654
        %p656 = scmp.lt.s32.totalorder %s34, 1
        %s657 = scalar_select %p656, %s34, 1
        %s658 = smul.addr %s657, 4
        %s659 = smul.addr %s658, 4
        %s660 = scalar_lea.vmem %s3, %s659
        %p661 = scmp.lt.s32.totalorder %s34, 1
        %s662 = scalar_select %p661, %s34, 1
        %s663 = scalar_lea.vmem %s4, %s662
        %p664 = scmp.lt.s32.totalorder %s34, 1
        %s665 = scalar_select %p664, %s34, 1
        %s666 = smul.addr %s665, 4
        %s667 = smul.addr %s666, 4
        %s668 = scalar_lea.vmem %s5, %s667
        %p669 = scmp.lt.s32.totalorder %s34, 1
        %s670 = scalar_select %p669, %s34, 1
        %s671 = scalar_lea.vmem %s6, %s670
        %p672 = scmp.lt.s32.totalorder %s34, 1
        %s673 = scalar_select %p672, %s34, 1
        %s674 = scalar_lea.vmem %s7, %s673
        %p675 = scmp.lt.s32.totalorder %s34, 1
        %s676 = scalar_select %p675, %s34, 1
        %s677 = scalar_lea.vmem %s8, %s676
        %p678 = scmp.lt.s32.totalorder %s34, 1
        %s679 = scalar_select %p678, %s34, 1
        %s680 = smul.addr %s679, 4
        %s681 = smul.addr %s680, 4
        %s682 = scalar_lea.vmem %s9, %s681
        %p683 = scmp.lt.s32.totalorder %s34, 1
        %s684 = scalar_select %p683, %s34, 1
        %s685 = scalar_lea.vmem %s10, %s684
        %p686 = scmp.lt.s32.totalorder %s34, 1
        %s687 = scalar_select %p686, %s34, 1
        %s688 = smul.addr %s687, 16
        %s689 = smul.addr %s688, 4
        %s690 = scalar_lea.vmem %s11, %s689
        %p691 = scmp.lt.s32.totalorder %s34, 1
        %s692 = scalar_select %p691, %s34, 1
        %s693 = scalar_lea.vmem %s12, %s692
        %p695 = scmp.eq.s32.totalorder %s34, 0
        // Predicated region
        $region81: #{_lambda_.1} parent=79 // pred_check
          %p696 = pneg %p695
        $region82: #{_lambda_.1} parent=79 // pred_check_branch
          %698 = sbr.rel (%p696) target = $region84
        $region83: #{_lambda_.1} parent=79 // pred_region
          %v699 = vld [vmem:[%s649] sm:$0xff]
          %vm700 = vcmask 261120
          %701 = vst.msk [vmem:[#allocation2] sm:$0xff] %vm700, %v699
        $region84: #{_lambda_.1} parent=79 // pred_fallthru
          _
        %v702 = vld [vmem:[#allocation2] sm:$0xff]
        %v703 = vld [vmem:[%s652] sm:$0x1]
        %v704 = vld [vmem:[%s655] sm:$0x1]
        %vm705 = vcmask 261120
        %v706 = vsel %vm705, %v702, 0.0
        %707 = vadd.xlane.f32.xlu0 %v706
        %v708 = vpop.xlane.xlu0 %707
        %v709 = vrcp.pop 32.0
        %v710 = vmul.f32 %v708, %v709
        %v711 = vsub.f32 %v702, %v710
        %v712 = vmul.f32 %v711, %v711
        %v713 = vsel %vm705, %v712, 0.0
        %714 = vadd.xlane.f32.xlu0 %v713
        %v715 = vpop.xlane.xlu0 %714
        %v716 = vmul.f32 %v715, %v709
        %v717 = vadd.f32 %v716, 1e-05
        %v718 = vrsqrt.pop %v717
        %v719 = vmul.f32 %v711, %v718
        %v721 = vlaneseq
        %v722 = vshrl.u32 %v721, 7
        %v723 = vsub.s32 0, %v722
        %v724 = vrot.slane %v703, %v723
        %v726 = vmul.f32 %v719, %v724
        %v728 = vlaneseq
        %v729 = vshrl.u32 %v728, 7
        %v730 = vsub.s32 0, %v729
        %v731 = vrot.slane %v704, %v730
        %v733 = vadd.f32 %v726, %v731
        %v734 = vpack.c.bf16 %v733, %v733
        %v735 = vld [vmem:[%s660] sm:$0xf]
        %v736 = vld [vmem:[%s660 + $0x4] sm:$0xf]
        %v737 = vld [vmem:[%s660 + $0x8] sm:$0xf]
        %v738 = vld [vmem:[%s660 + $0xc] sm:$0xf]
        %v739 = vld [vmem:[%s663] sm:$0x1]
        %v741 = vlaneseq
        %v742 = vshrl.u32 %v741, 7
        %v743 = vsub.s32 0, %v742
        %v744 = vrot.slane %v739, %v743
        %v750 = vunpack.c.l.b16 %v735
        %v751 = vunpack.c.l.b16 %v736
        %v752 = vunpack.c.l.b16 %v737
        %v753 = vunpack.c.l.b16 %v738
        %v754 = vpack.c.b16 %v751, %v750
        %v755 = vpack.c.b16 %v753, %v752
        %v759 = vsel %vm705, %v734, 0
        %761 = vmatprep.subr.bf16.mxu0 0
        %762 = vmatpush1.bf16.msra.mxu0 %v754
        %763 = vmatprep.subr.bf16.mxu0 0
        %764 = vmatpush1.bf16.msra.mxu0 %v755
        %765 = vmatprep.subr.bf16.mxu0 0
        %766 = vmatpush1.bf16.msra.mxu0 0
        %767 = vmatprep.subr.bf16.mxu0 0
        %768 = vmatpush1.bf16.msra.mxu0 0
        %769 = vmatprep.subr.bf16.mxu0 0
        %770 = vmatpush1.bf16.msra.mxu0 0
        %771 = vmatprep.subr.bf16.mxu0 0
        %772 = vmatpush1.bf16.msra.mxu0 0
        %773 = vmatprep.subr.bf16.mxu0 0
        %774 = vmatpush1.bf16.msra.mxu0 0
        %775 = vmatprep.subr.bf16.mxu0 0
        %776 = vmatpush1.bf16.msra.mxu0 0
        %777 = vmatprep.subr.bf16.mxu0 0
        %778 = vmatpush1.bf16.msra.mxu0 0
        %779 = vmatprep.subr.bf16.mxu0 0
        %780 = vmatpush1.bf16.msra.mxu0 0
        %781 = vmatprep.subr.bf16.mxu0 0
        %782 = vmatpush1.bf16.msra.mxu0 0
        %783 = vmatprep.subr.bf16.mxu0 0
        %784 = vmatpush1.bf16.msra.mxu0 0
        %785 = vmatprep.subr.bf16.mxu0 0
        %786 = vmatpush1.bf16.msra.mxu0 0
        %787 = vmatprep.subr.bf16.mxu0 0
        %788 = vmatpush1.bf16.msra.mxu0 0
        %789 = vmatprep.subr.bf16.mxu0 0
        %790 = vmatpush1.bf16.msra.mxu0 0
        %791 = vmatprep.subr.bf16.mxu0 0
        %792 = vmatpush1.bf16.msra.mxu0 0
        %793 = vmatprep.mubr.bf16.mxu0 0
        %794 = vmatmul.mubr.bf16.gmra.mrb[0].mxu0 %v759
        %v795 = vpop.f32.mrb[0].mxu0
        %v796 = vadd.f32 %v744, %v795
        %v797 = vpop.f32.mrb[0].mxu0
        %v798 = vpop.f32.mrb[0].mxu0
        %v799 = vpop.f32.mrb[0].mxu0
        %800 = vdwg.mxu0
        %v801 = vpack.c.bf16 %v796, %v796
        %803 = vrot.lane.b32.xlu0 %v801, 120
        %v804 = vpop.permute.xlu0 %803
        %805 = vrot.lane.b32.xlu0 %v801, 112
        %v806 = vpop.permute.xlu0 %805
        %807 = vrot.lane.b32.xlu0 %v801, 104
        %v808 = vpop.permute.xlu0 %807
        %v810 = vunpack.c.l.s4 1983009808
        %v811 = vunpack.c.0.s8 %v810
        %v812 = vlaneseq
        %v813 = vshrl.u32 %v812, 7
        %v814 = vsub.s32 %v811, %v813
        %v815 = vrot.slane %v801, %v814
        %v818 = vunpack.c.l.s4 1983009808
        %v819 = vunpack.c.0.s8 %v818
        %v820 = vlaneseq
        %v821 = vshrl.u32 %v820, 7
        %v822 = vsub.s32 %v819, %v821
        %v823 = vrot.slane %v806, %v822
        %v824 = vcombine.low %v815, %v823
        %v825 = vcombine.high %v815, %v823
        %v827 = vunpack.c.l.s4 1934713408
        %v828 = vunpack.c.0.s8 %v827
        %v829 = vlaneseq
        %v830 = vshrl.u32 %v829, 7
        %v831 = vsub.s32 %v828, %v830
        %v832 = vrot.slane %v824, %v831
        %v834 = vunpack.c.l.s4 1934713408
        %v835 = vunpack.c.0.s8 %v834
        %v836 = vlaneseq
        %v837 = vshrl.u32 %v836, 7
        %v838 = vsub.s32 %v835, %v837
        %v839 = vrot.slane %v825, %v838
        %v840 = vcombine.high %v832, 0
        %v841 = vcombine.high %v839, 0
        %v844 = vunpack.c.l.s4 1983009808
        %v845 = vunpack.c.0.s8 %v844
        %v846 = vlaneseq
        %v847 = vshrl.u32 %v846, 7
        %v848 = vsub.s32 %v845, %v847
        %v849 = vrot.slane %v804, %v848
        %v852 = vunpack.c.l.s4 1983009808
        %v853 = vunpack.c.0.s8 %v852
        %v854 = vlaneseq
        %v855 = vshrl.u32 %v854, 7
        %v856 = vsub.s32 %v853, %v855
        %v857 = vrot.slane %v808, %v856
        %v858 = vcombine.low %v849, %v857
        %v859 = vcombine.high %v849, %v857
        %v861 = vunpack.c.l.s4 1934713408
        %v862 = vunpack.c.0.s8 %v861
        %v863 = vlaneseq
        %v864 = vshrl.u32 %v863, 7
        %v865 = vsub.s32 %v862, %v864
        %v866 = vrot.slane %v858, %v865
        %v868 = vunpack.c.l.s4 1934713408
        %v869 = vunpack.c.0.s8 %v868
        %v870 = vlaneseq
        %v871 = vshrl.u32 %v870, 7
        %v872 = vsub.s32 %v869, %v871
        %v873 = vrot.slane %v859, %v872
        %v874 = vcombine.high %v866, 0
        %v875 = vcombine.high %v873, 0
        %v878 = vpack.i.b16 %v866, %v832
        %v880 = vshrl.u32 %v832, 16
        %v881 = vshrl.u32 %v866, 16
        %v882 = vpack.i.b16 %v881, %v880
        %v886 = vpack.i.b16 %v874, %v840
        %v888 = vshrl.u32 %v840, 16
        %v889 = vshrl.u32 %v874, 16
        %v890 = vpack.i.b16 %v889, %v888
        %v894 = vpack.i.b16 %v873, %v839
        %v896 = vshrl.u32 %v839, 16
        %v897 = vshrl.u32 %v873, 16
        %v898 = vpack.i.b16 %v897, %v896
        %v902 = vpack.i.b16 %v875, %v841
        %v904 = vshrl.u32 %v841, 16
        %v905 = vshrl.u32 %v875, 16
        %v906 = vpack.i.b16 %v905, %v904
        %v908 = vcombine.low %v878, %v894
        %v910 = vunpack.c.l.s4 1983009808
        %v911 = vunpack.c.0.s8 %v910
        %v912 = vlaneseq
        %v913 = vshrl.u32 %v912, 7
        %v914 = vsub.s32 %v911, %v913
        %v915 = vrot.slane %v908, %v914
        %v916 = vcombine.low %v886, %v902
        %v918 = vunpack.c.l.s4 1983009808
        %v919 = vunpack.c.0.s8 %v918
        %v920 = vlaneseq
        %v921 = vshrl.u32 %v920, 7
        %v922 = vsub.s32 %v919, %v921
        %v923 = vrot.slane %v916, %v922
        %v924 = vcombine.low %v915, %v923
        %v926 = vunpack.c.l.s4 1934713408
        %v927 = vunpack.c.0.s8 %v926
        %v928 = vlaneseq
        %v929 = vshrl.u32 %v928, 7
        %v930 = vsub.s32 %v927, %v929
        %v931 = vrot.slane %v924, %v930
        %v932 = vcombine.high %v931, 0
        %v933 = vcombine.low %v882, %v898
        %v935 = vunpack.c.l.s4 1983009808
        %v936 = vunpack.c.0.s8 %v935
        %v937 = vlaneseq
        %v938 = vshrl.u32 %v937, 7
        %v939 = vsub.s32 %v936, %v938
        %v940 = vrot.slane %v933, %v939
        %v941 = vcombine.low %v890, %v906
        %v943 = vunpack.c.l.s4 1983009808
        %v944 = vunpack.c.0.s8 %v943
        %v945 = vlaneseq
        %v946 = vshrl.u32 %v945, 7
        %v947 = vsub.s32 %v944, %v946
        %v948 = vrot.slane %v941, %v947
        %v949 = vcombine.low %v940, %v948
        %v951 = vunpack.c.l.s4 1934713408
        %v952 = vunpack.c.0.s8 %v951
        %v953 = vlaneseq
        %v954 = vshrl.u32 %v953, 7
        %v955 = vsub.s32 %v952, %v954
        %v956 = vrot.slane %v949, %v955
        %v957 = vcombine.high %v956, 0
        %v960 = vpack.i.b16 %v956, %v931
        %v961 = vshrl.u32 %v931, 16
        %v962 = vshrl.u32 %v956, 16
        %v963 = vpack.i.b16 %v962, %v961
        %v966 = vpack.i.b16 %v957, %v932
        %v967 = vshrl.u32 %v932, 16
        %v968 = vshrl.u32 %v957, 16
        %v969 = vpack.i.b16 %v968, %v967
        %970 = vrot.lane.b32.xlu0 %v801, 96
        %v971 = vpop.permute.xlu0 %970
        %972 = vrot.lane.b32.xlu0 %v804, 96
        %v973 = vpop.permute.xlu0 %972
        %974 = vrot.lane.b32.xlu0 %v806, 96
        %v975 = vpop.permute.xlu0 %974
        %976 = vrot.lane.b32.xlu0 %v808, 96
        %v977 = vpop.permute.xlu0 %976
        %v980 = vunpack.c.l.s4 1983009808
        %v981 = vunpack.c.0.s8 %v980
        %v982 = vlaneseq
        %v983 = vshrl.u32 %v982, 7
        %v984 = vsub.s32 %v981, %v983
        %v985 = vrot.slane %v971, %v984
        %v988 = vunpack.c.l.s4 1983009808
        %v989 = vunpack.c.0.s8 %v988
        %v990 = vlaneseq
        %v991 = vshrl.u32 %v990, 7
        %v992 = vsub.s32 %v989, %v991
        %v993 = vrot.slane %v975, %v992
        %v994 = vcombine.low %v985, %v993
        %v995 = vcombine.high %v985, %v993
        %v997 = vunpack.c.l.s4 1934713408
        %v998 = vunpack.c.0.s8 %v997
        %v999 = vlaneseq
        %v1000 = vshrl.u32 %v999, 7
        %v1001 = vsub.s32 %v998, %v1000
        %v1002 = vrot.slane %v994, %v1001
        %v1004 = vunpack.c.l.s4 1934713408
        %v1005 = vunpack.c.0.s8 %v1004
        %v1006 = vlaneseq
        %v1007 = vshrl.u32 %v1006, 7
        %v1008 = vsub.s32 %v1005, %v1007
        %v1009 = vrot.slane %v995, %v1008
        %v1010 = vcombine.high %v1002, 0
        %v1011 = vcombine.high %v1009, 0
        %v1014 = vunpack.c.l.s4 1983009808
        %v1015 = vunpack.c.0.s8 %v1014
        %v1016 = vlaneseq
        %v1017 = vshrl.u32 %v1016, 7
        %v1018 = vsub.s32 %v1015, %v1017
        %v1019 = vrot.slane %v973, %v1018
        %v1022 = vunpack.c.l.s4 1983009808
        %v1023 = vunpack.c.0.s8 %v1022
        %v1024 = vlaneseq
        %v1025 = vshrl.u32 %v1024, 7
        %v1026 = vsub.s32 %v1023, %v1025
        %v1027 = vrot.slane %v977, %v1026
        %v1028 = vcombine.low %v1019, %v1027
        %v1029 = vcombine.high %v1019, %v1027
        %v1031 = vunpack.c.l.s4 1934713408
        %v1032 = vunpack.c.0.s8 %v1031
        %v1033 = vlaneseq
        %v1034 = vshrl.u32 %v1033, 7
        %v1035 = vsub.s32 %v1032, %v1034
        %v1036 = vrot.slane %v1028, %v1035
        %v1038 = vunpack.c.l.s4 1934713408
        %v1039 = vunpack.c.0.s8 %v1038
        %v1040 = vlaneseq
        %v1041 = vshrl.u32 %v1040, 7
        %v1042 = vsub.s32 %v1039, %v1041
        %v1043 = vrot.slane %v1029, %v1042
        %v1044 = vcombine.high %v1036, 0
        %v1045 = vcombine.high %v1043, 0
        %v1048 = vpack.i.b16 %v1036, %v1002
        %v1050 = vshrl.u32 %v1002, 16
        %v1051 = vshrl.u32 %v1036, 16
        %v1052 = vpack.i.b16 %v1051, %v1050
        %v1056 = vpack.i.b16 %v1044, %v1010
        %v1058 = vshrl.u32 %v1010, 16
        %v1059 = vshrl.u32 %v1044, 16
        %v1060 = vpack.i.b16 %v1059, %v1058
        %v1064 = vpack.i.b16 %v1043, %v1009
        %v1066 = vshrl.u32 %v1009, 16
        %v1067 = vshrl.u32 %v1043, 16
        %v1068 = vpack.i.b16 %v1067, %v1066
        %v1072 = vpack.i.b16 %v1045, %v1011
        %v1074 = vshrl.u32 %v1011, 16
        %v1075 = vshrl.u32 %v1045, 16
        %v1076 = vpack.i.b16 %v1075, %v1074
        %v1078 = vcombine.low %v1048, %v1064
        %v1080 = vunpack.c.l.s4 1983009808
        %v1081 = vunpack.c.0.s8 %v1080
        %v1082 = vlaneseq
        %v1083 = vshrl.u32 %v1082, 7
        %v1084 = vsub.s32 %v1081, %v1083
        %v1085 = vrot.slane %v1078, %v1084
        %v1086 = vcombine.low %v1056, %v1072
        %v1088 = vunpack.c.l.s4 1983009808
        %v1089 = vunpack.c.0.s8 %v1088
        %v1090 = vlaneseq
        %v1091 = vshrl.u32 %v1090, 7
        %v1092 = vsub.s32 %v1089, %v1091
        %v1093 = vrot.slane %v1086, %v1092
        %v1094 = vcombine.low %v1085, %v1093
        %v1096 = vunpack.c.l.s4 1934713408
        %v1097 = vunpack.c.0.s8 %v1096
        %v1098 = vlaneseq
        %v1099 = vshrl.u32 %v1098, 7
        %v1100 = vsub.s32 %v1097, %v1099
        %v1101 = vrot.slane %v1094, %v1100
        %v1102 = vcombine.high %v1101, 0
        %v1103 = vcombine.low %v1052, %v1068
        %v1105 = vunpack.c.l.s4 1983009808
        %v1106 = vunpack.c.0.s8 %v1105
        %v1107 = vlaneseq
        %v1108 = vshrl.u32 %v1107, 7
        %v1109 = vsub.s32 %v1106, %v1108
        %v1110 = vrot.slane %v1103, %v1109
        %v1111 = vcombine.low %v1060, %v1076
        %v1113 = vunpack.c.l.s4 1983009808
        %v1114 = vunpack.c.0.s8 %v1113
        %v1115 = vlaneseq
        %v1116 = vshrl.u32 %v1115, 7
        %v1117 = vsub.s32 %v1114, %v1116
        %v1118 = vrot.slane %v1111, %v1117
        %v1119 = vcombine.low %v1110, %v1118
        %v1121 = vunpack.c.l.s4 1934713408
        %v1122 = vunpack.c.0.s8 %v1121
        %v1123 = vlaneseq
        %v1124 = vshrl.u32 %v1123, 7
        %v1125 = vsub.s32 %v1122, %v1124
        %v1126 = vrot.slane %v1119, %v1125
        %v1127 = vcombine.high %v1126, 0
        %v1130 = vpack.i.b16 %v1126, %v1101
        %v1131 = vshrl.u32 %v1101, 16
        %v1132 = vshrl.u32 %v1126, 16
        %v1133 = vpack.i.b16 %v1132, %v1131
        %v1136 = vpack.i.b16 %v1127, %v1102
        %v1137 = vshrl.u32 %v1102, 16
        %v1138 = vshrl.u32 %v1127, 16
        %v1139 = vpack.i.b16 %v1138, %v1137
        %1140 = vrot.lane.b32.xlu0 %v801, 64
        %v1141 = vpop.permute.xlu0 %1140
        %1142 = vrot.lane.b32.xlu0 %v804, 64
        %v1143 = vpop.permute.xlu0 %1142
        %1144 = vrot.lane.b32.xlu0 %v806, 64
        %v1145 = vpop.permute.xlu0 %1144
        %1146 = vrot.lane.b32.xlu0 %v808, 64
        %v1147 = vpop.permute.xlu0 %1146
        %v1150 = vunpack.c.l.s4 1983009808
        %v1151 = vunpack.c.0.s8 %v1150
        %v1152 = vlaneseq
        %v1153 = vshrl.u32 %v1152, 7
        %v1154 = vsub.s32 %v1151, %v1153
        %v1155 = vrot.slane %v1141, %v1154
        %v1158 = vunpack.c.l.s4 1983009808
        %v1159 = vunpack.c.0.s8 %v1158
        %v1160 = vlaneseq
        %v1161 = vshrl.u32 %v1160, 7
        %v1162 = vsub.s32 %v1159, %v1161
        %v1163 = vrot.slane %v1145, %v1162
        %v1164 = vcombine.low %v1155, %v1163
        %v1165 = vcombine.high %v1155, %v1163
        %v1167 = vunpack.c.l.s4 1934713408
        %v1168 = vunpack.c.0.s8 %v1167
        %v1169 = vlaneseq
        %v1170 = vshrl.u32 %v1169, 7
        %v1171 = vsub.s32 %v1168, %v1170
        %v1172 = vrot.slane %v1164, %v1171
        %v1174 = vunpack.c.l.s4 1934713408
        %v1175 = vunpack.c.0.s8 %v1174
        %v1176 = vlaneseq
        %v1177 = vshrl.u32 %v1176, 7
        %v1178 = vsub.s32 %v1175, %v1177
        %v1179 = vrot.slane %v1165, %v1178
        %v1180 = vcombine.high %v1172, 0
        %v1181 = vcombine.high %v1179, 0
        %v1184 = vunpack.c.l.s4 1983009808
        %v1185 = vunpack.c.0.s8 %v1184
        %v1186 = vlaneseq
        %v1187 = vshrl.u32 %v1186, 7
        %v1188 = vsub.s32 %v1185, %v1187
        %v1189 = vrot.slane %v1143, %v1188
        %v1192 = vunpack.c.l.s4 1983009808
        %v1193 = vunpack.c.0.s8 %v1192
        %v1194 = vlaneseq
        %v1195 = vshrl.u32 %v1194, 7
        %v1196 = vsub.s32 %v1193, %v1195
        %v1197 = vrot.slane %v1147, %v1196
        %v1198 = vcombine.low %v1189, %v1197
        %v1199 = vcombine.high %v1189, %v1197
        %v1201 = vunpack.c.l.s4 1934713408
        %v1202 = vunpack.c.0.s8 %v1201
        %v1203 = vlaneseq
        %v1204 = vshrl.u32 %v1203, 7
        %v1205 = vsub.s32 %v1202, %v1204
        %v1206 = vrot.slane %v1198, %v1205
        %v1208 = vunpack.c.l.s4 1934713408
        %v1209 = vunpack.c.0.s8 %v1208
        %v1210 = vlaneseq
        %v1211 = vshrl.u32 %v1210, 7
        %v1212 = vsub.s32 %v1209, %v1211
        %v1213 = vrot.slane %v1199, %v1212
        %v1214 = vcombine.high %v1206, 0
        %v1215 = vcombine.high %v1213, 0
        %v1218 = vpack.i.b16 %v1206, %v1172
        %v1220 = vshrl.u32 %v1172, 16
        %v1221 = vshrl.u32 %v1206, 16
        %v1222 = vpack.i.b16 %v1221, %v1220
        %v1226 = vpack.i.b16 %v1214, %v1180
        %v1228 = vshrl.u32 %v1180, 16
        %v1229 = vshrl.u32 %v1214, 16
        %v1230 = vpack.i.b16 %v1229, %v1228
        %v1234 = vpack.i.b16 %v1213, %v1179
        %v1236 = vshrl.u32 %v1179, 16
        %v1237 = vshrl.u32 %v1213, 16
        %v1238 = vpack.i.b16 %v1237, %v1236
        %v1242 = vpack.i.b16 %v1215, %v1181
        %v1244 = vshrl.u32 %v1181, 16
        %v1245 = vshrl.u32 %v1215, 16
        %v1246 = vpack.i.b16 %v1245, %v1244
        %v1248 = vcombine.low %v1218, %v1234
        %v1250 = vunpack.c.l.s4 1983009808
        %v1251 = vunpack.c.0.s8 %v1250
        %v1252 = vlaneseq
        %v1253 = vshrl.u32 %v1252, 7
        %v1254 = vsub.s32 %v1251, %v1253
        %v1255 = vrot.slane %v1248, %v1254
        %v1256 = vcombine.low %v1226, %v1242
        %v1258 = vunpack.c.l.s4 1983009808
        %v1259 = vunpack.c.0.s8 %v1258
        %v1260 = vlaneseq
        %v1261 = vshrl.u32 %v1260, 7
        %v1262 = vsub.s32 %v1259, %v1261
        %v1263 = vrot.slane %v1256, %v1262
        %v1264 = vcombine.low %v1255, %v1263
        %v1266 = vunpack.c.l.s4 1934713408
        %v1267 = vunpack.c.0.s8 %v1266
        %v1268 = vlaneseq
        %v1269 = vshrl.u32 %v1268, 7
        %v1270 = vsub.s32 %v1267, %v1269
        %v1271 = vrot.slane %v1264, %v1270
        %v1272 = vcombine.high %v1271, 0
        %v1273 = vcombine.low %v1222, %v1238
        %v1275 = vunpack.c.l.s4 1983009808
        %v1276 = vunpack.c.0.s8 %v1275
        %v1277 = vlaneseq
        %v1278 = vshrl.u32 %v1277, 7
        %v1279 = vsub.s32 %v1276, %v1278
        %v1280 = vrot.slane %v1273, %v1279
        %v1281 = vcombine.low %v1230, %v1246
        %v1283 = vunpack.c.l.s4 1983009808
        %v1284 = vunpack.c.0.s8 %v1283
        %v1285 = vlaneseq
        %v1286 = vshrl.u32 %v1285, 7
        %v1287 = vsub.s32 %v1284, %v1286
        %v1288 = vrot.slane %v1281, %v1287
        %v1289 = vcombine.low %v1280, %v1288
        %v1291 = vunpack.c.l.s4 1934713408
        %v1292 = vunpack.c.0.s8 %v1291
        %v1293 = vlaneseq
        %v1294 = vshrl.u32 %v1293, 7
        %v1295 = vsub.s32 %v1292, %v1294
        %v1296 = vrot.slane %v1289, %v1295
        %v1297 = vcombine.high %v1296, 0
        %v1300 = vpack.i.b16 %v1296, %v1271
        %v1301 = vshrl.u32 %v1271, 16
        %v1302 = vshrl.u32 %v1296, 16
        %v1303 = vpack.i.b16 %v1302, %v1301
        %v1306 = vpack.i.b16 %v1297, %v1272
        %v1307 = vshrl.u32 %v1272, 16
        %v1308 = vshrl.u32 %v1297, 16
        %v1309 = vpack.i.b16 %v1308, %v1307
        %vm1310 = vcmask 64512
        %v1312 = vsel %vm1310, %v960, 0
        %v1315 = vsel %vm1310, %v1130, 0
        %1317 = vmatprep.subr.bf16.mxu0 0
        %1318 = vmatpush1.bf16.xpose.msra.mxu0 %v1315
        %1319 = vmatprep.subr.bf16.mxu0 0
        %1320 = vmatpush1.bf16.xpose.msra.mxu0 0
        %1321 = vmatprep.subr.bf16.mxu0 0
        %1322 = vmatpush1.bf16.xpose.msra.mxu0 0
        %1323 = vmatprep.subr.bf16.mxu0 0
        %1324 = vmatpush1.bf16.xpose.msra.mxu0 0
        %1325 = vmatprep.subr.bf16.mxu0 0
        %1326 = vmatpush1.bf16.xpose.msra.mxu0 0
        %1327 = vmatprep.subr.bf16.mxu0 0
        %1328 = vmatpush1.bf16.xpose.msra.mxu0 0
        %1329 = vmatprep.subr.bf16.mxu0 0
        %1330 = vmatpush1.bf16.xpose.msra.mxu0 0
        %1331 = vmatprep.subr.bf16.mxu0 0
        %1332 = vmatpush1.bf16.xpose.msra.mxu0 0
        %1333 = vmatprep.subr.bf16.mxu0 0
        %1334 = vmatpush1.bf16.xpose.msra.mxu0 0
        %1335 = vmatprep.subr.bf16.mxu0 0
        %1336 = vmatpush1.bf16.xpose.msra.mxu0 0
        %1337 = vmatprep.subr.bf16.mxu0 0
        %1338 = vmatpush1.bf16.xpose.msra.mxu0 0
        %1339 = vmatprep.subr.bf16.mxu0 0
        %1340 = vmatpush1.bf16.xpose.msra.mxu0 0
        %1341 = vmatprep.subr.bf16.mxu0 0
        %1342 = vmatpush1.bf16.xpose.msra.mxu0 0
        %1343 = vmatprep.subr.bf16.mxu0 0
        %1344 = vmatpush1.bf16.xpose.msra.mxu0 0
        %1345 = vmatprep.subr.bf16.mxu0 0
        %1346 = vmatpush1.bf16.xpose.msra.mxu0 0
        %1347 = vmatprep.subr.bf16.mxu0 0
        %1348 = vmatpush1.bf16.xpose.msra.mxu0 0
        %1349 = vmatprep.mubr.bf16.mxu0 0
        %1350 = vmatmul.mubr.bf16.gmra.mrb[0].mxu0 %v1312
        %v1351 = vpop.f32.mrb[0].mxu0
        %v1352 = vadd.f32 0.0, %v1351
        %v1353 = vpop.f32.mrb[0].mxu0
        %v1354 = vpop.f32.mrb[0].mxu0
        %v1355 = vpop.f32.mrb[0].mxu0
        %1356 = vdwg.mxu0
        %v1358 = vsel %vm1310, %v963, 0
        %v1361 = vsel %vm1310, %v1133, 0
        %1363 = vmatprep.subr.bf16.mxu0 0
        %1364 = vmatpush1.bf16.xpose.msra.mxu0 %v1361
        %1365 = vmatprep.subr.bf16.mxu0 0
        %1366 = vmatpush1.bf16.xpose.msra.mxu0 0
        %1367 = vmatprep.subr.bf16.mxu0 0
        %1368 = vmatpush1.bf16.xpose.msra.mxu0 0
        %1369 = vmatprep.subr.bf16.mxu0 0
        %1370 = vmatpush1.bf16.xpose.msra.mxu0 0
        %1371 = vmatprep.subr.bf16.mxu0 0
        %1372 = vmatpush1.bf16.xpose.msra.mxu0 0
        %1373 = vmatprep.subr.bf16.mxu0 0
        %1374 = vmatpush1.bf16.xpose.msra.mxu0 0
        %1375 = vmatprep.subr.bf16.mxu0 0
        %1376 = vmatpush1.bf16.xpose.msra.mxu0 0
        %1377 = vmatprep.subr.bf16.mxu0 0
        %1378 = vmatpush1.bf16.xpose.msra.mxu0 0
        %1379 = vmatprep.subr.bf16.mxu0 0
        %1380 = vmatpush1.bf16.xpose.msra.mxu0 0
        %1381 = vmatprep.subr.bf16.mxu0 0
        %1382 = vmatpush1.bf16.xpose.msra.mxu0 0
        %1383 = vmatprep.subr.bf16.mxu0 0
        %1384 = vmatpush1.bf16.xpose.msra.mxu0 0
        %1385 = vmatprep.subr.bf16.mxu0 0
        %1386 = vmatpush1.bf16.xpose.msra.mxu0 0
        %1387 = vmatprep.subr.bf16.mxu0 0
        %1388 = vmatpush1.bf16.xpose.msra.mxu0 0
        %1389 = vmatprep.subr.bf16.mxu0 0
        %1390 = vmatpush1.bf16.xpose.msra.mxu0 0
        %1391 = vmatprep.subr.bf16.mxu0 0
        %1392 = vmatpush1.bf16.xpose.msra.mxu0 0
        %1393 = vmatprep.subr.bf16.mxu0 0
        %1394 = vmatpush1.bf16.xpose.msra.mxu0 0
        %1395 = vmatprep.mubr.bf16.mxu0 0
        %1396 = vmatmul.mubr.bf16.gmra.mrb[0].mxu0 %v1358
        %v1397 = vpop.f32.mrb[0].mxu0
        %v1398 = vadd.f32 0.0, %v1397
        %v1399 = vpop.f32.mrb[0].mxu0
        %v1400 = vpop.f32.mrb[0].mxu0
        %v1401 = vpop.f32.mrb[0].mxu0
        %1402 = vdwg.mxu0
        %v1404 = vsel %vm1310, %v966, 0
        %v1407 = vsel %vm1310, %v1136, 0
        %1409 = vmatprep.subr.bf16.mxu0 0
        %1410 = vmatpush1.bf16.xpose.msra.mxu0 %v1407
        %1411 = vmatprep.subr.bf16.mxu0 0
        %1412 = vmatpush1.bf16.xpose.msra.mxu0 0
        %1413 = vmatprep.subr.bf16.mxu0 0
        %1414 = vmatpush1.bf16.xpose.msra.mxu0 0
        %1415 = vmatprep.subr.bf16.mxu0 0
        %1416 = vmatpush1.bf16.xpose.msra.mxu0 0
        %1417 = vmatprep.subr.bf16.mxu0 0
        %1418 = vmatpush1.bf16.xpose.msra.mxu0 0
        %1419 = vmatprep.subr.bf16.mxu0 0
        %1420 = vmatpush1.bf16.xpose.msra.mxu0 0
        %1421 = vmatprep.subr.bf16.mxu0 0
        %1422 = vmatpush1.bf16.xpose.msra.mxu0 0
        %1423 = vmatprep.subr.bf16.mxu0 0
        %1424 = vmatpush1.bf16.xpose.msra.mxu0 0
        %1425 = vmatprep.subr.bf16.mxu0 0
        %1426 = vmatpush1.bf16.xpose.msra.mxu0 0
        %1427 = vmatprep.subr.bf16.mxu0 0
        %1428 = vmatpush1.bf16.xpose.msra.mxu0 0
        %1429 = vmatprep.subr.bf16.mxu0 0
        %1430 = vmatpush1.bf16.xpose.msra.mxu0 0
        %1431 = vmatprep.subr.bf16.mxu0 0
        %1432 = vmatpush1.bf16.xpose.msra.mxu0 0
        %1433 = vmatprep.subr.bf16.mxu0 0
        %1434 = vmatpush1.bf16.xpose.msra.mxu0 0
        %1435 = vmatprep.subr.bf16.mxu0 0
        %1436 = vmatpush1.bf16.xpose.msra.mxu0 0
        %1437 = vmatprep.subr.bf16.mxu0 0
        %1438 = vmatpush1.bf16.xpose.msra.mxu0 0
        %1439 = vmatprep.subr.bf16.mxu0 0
        %1440 = vmatpush1.bf16.xpose.msra.mxu0 0
        %1441 = vmatprep.mubr.bf16.mxu0 0
        %1442 = vmatmul.mubr.bf16.gmra.mrb[0].mxu0 %v1404
        %v1443 = vpop.f32.mrb[0].mxu0
        %v1444 = vadd.f32 0.0, %v1443
        %v1445 = vpop.f32.mrb[0].mxu0
        %v1446 = vpop.f32.mrb[0].mxu0
        %v1447 = vpop.f32.mrb[0].mxu0
        %1448 = vdwg.mxu0
        %v1450 = vsel %vm1310, %v969, 0
        %v1453 = vsel %vm1310, %v1139, 0
        %1455 = vmatprep.subr.bf16.mxu0 0
        %1456 = vmatpush1.bf16.xpose.msra.mxu0 %v1453
        %1457 = vmatprep.subr.bf16.mxu0 0
        %1458 = vmatpush1.bf16.xpose.msra.mxu0 0
        %1459 = vmatprep.subr.bf16.mxu0 0
        %1460 = vmatpush1.bf16.xpose.msra.mxu0 0
        %1461 = vmatprep.subr.bf16.mxu0 0
        %1462 = vmatpush1.bf16.xpose.msra.mxu0 0
        %1463 = vmatprep.subr.bf16.mxu0 0
        %1464 = vmatpush1.bf16.xpose.msra.mxu0 0
        %1465 = vmatprep.subr.bf16.mxu0 0
        %1466 = vmatpush1.bf16.xpose.msra.mxu0 0
        %1467 = vmatprep.subr.bf16.mxu0 0
        %1468 = vmatpush1.bf16.xpose.msra.mxu0 0
        %1469 = vmatprep.subr.bf16.mxu0 0
        %1470 = vmatpush1.bf16.xpose.msra.mxu0 0
        %1471 = vmatprep.subr.bf16.mxu0 0
        %1472 = vmatpush1.bf16.xpose.msra.mxu0 0
        %1473 = vmatprep.subr.bf16.mxu0 0
        %1474 = vmatpush1.bf16.xpose.msra.mxu0 0
        %1475 = vmatprep.subr.bf16.mxu0 0
        %1476 = vmatpush1.bf16.xpose.msra.mxu0 0
        %1477 = vmatprep.subr.bf16.mxu0 0
        %1478 = vmatpush1.bf16.xpose.msra.mxu0 0
        %1479 = vmatprep.subr.bf16.mxu0 0
        %1480 = vmatpush1.bf16.xpose.msra.mxu0 0
        %1481 = vmatprep.subr.bf16.mxu0 0
        %1482 = vmatpush1.bf16.xpose.msra.mxu0 0
        %1483 = vmatprep.subr.bf16.mxu0 0
        %1484 = vmatpush1.bf16.xpose.msra.mxu0 0
        %1485 = vmatprep.subr.bf16.mxu0 0
        %1486 = vmatpush1.bf16.xpose.msra.mxu0 0
        %1487 = vmatprep.mubr.bf16.mxu0 0
        %1488 = vmatmul.mubr.bf16.gmra.mrb[0].mxu0 %v1450
        %v1489 = vpop.f32.mrb[0].mxu0
        %v1490 = vadd.f32 0.0, %v1489
        %v1491 = vpop.f32.mrb[0].mxu0
        %v1492 = vpop.f32.mrb[0].mxu0
        %v1493 = vpop.f32.mrb[0].mxu0
        %1494 = vdwg.mxu0
        %v1495 = vsel %vm1310, %v1352, -inf
        %1496 = vmax.xlane.f32.xlu0 %v1495
        %v1497 = vpop.xlane.xlu0 %1496
        %v1498 = vsel %vm1310, %v1398, -inf
        %1499 = vmax.xlane.f32.xlu0 %v1498
        %v1500 = vpop.xlane.xlu0 %1499
        %v1501 = vsel %vm1310, %v1444, -inf
        %1502 = vmax.xlane.f32.xlu0 %v1501
        %v1503 = vpop.xlane.xlu0 %1502
        %v1504 = vsel %vm1310, %v1490, -inf
        %1505 = vmax.xlane.f32.xlu0 %v1504
        %v1506 = vpop.xlane.xlu0 %1505
        %v1507 = vsub.f32 %v1352, %v1497
        %v1508 = vsub.f32 %v1398, %v1500
        %v1509 = vsub.f32 %v1444, %v1503
        %v1510 = vsub.f32 %v1490, %v1506
        %v1511 = vmul.f32 %v1507, 1.442695
        %v1512 = vpow.pop %v1511
        %v1513 = vmul.f32 %v1508, 1.442695
        %v1514 = vpow.pop %v1513
        %v1515 = vmul.f32 %v1509, 1.442695
        %v1516 = vpow.pop %v1515
        %v1517 = vmul.f32 %v1510, 1.442695
        %v1518 = vpow.pop %v1517
        %v1519 = vsel %vm1310, %v1512, 0.0
        %1520 = vadd.xlane.f32.xlu0 %v1519
        %v1521 = vpop.xlane.xlu0 %1520
        %v1522 = vsel %vm1310, %v1514, 0.0
        %1523 = vadd.xlane.f32.xlu0 %v1522
        %v1524 = vpop.xlane.xlu0 %1523
        %v1525 = vsel %vm1310, %v1516, 0.0
        %1526 = vadd.xlane.f32.xlu0 %v1525
        %v1527 = vpop.xlane.xlu0 %1526
        %v1528 = vsel %vm1310, %v1518, 0.0
        %1529 = vadd.xlane.f32.xlu0 %v1528
        %v1530 = vpop.xlane.xlu0 %1529
        %v1531 = vrcp.pop %v1521
        %v1532 = vmul.f32 %v1512, %v1531
        %v1533 = vrcp.pop %v1524
        %v1534 = vmul.f32 %v1514, %v1533
        %v1535 = vrcp.pop %v1527
        %v1536 = vmul.f32 %v1516, %v1535
        %v1537 = vrcp.pop %v1530
        %v1538 = vmul.f32 %v1518, %v1537
        %v1539 = vpack.c.bf16 %v1532, %v1532
        %v1540 = vpack.c.bf16 %v1534, %v1534
        %v1541 = vpack.c.bf16 %v1536, %v1536
        %v1542 = vpack.c.bf16 %v1538, %v1538
        %v1544 = vsel %vm1310, %v1539, 0
        %vm1546 = vcmask 1043456
        %v1548 = vsel %vm1546, %v1300, 0
        %1550 = vmatprep.subr.bf16.mxu0 0
        %1551 = vmatpush1.bf16.msra.mxu0 %v1548
        %1552 = vmatprep.subr.bf16.mxu0 0
        %1553 = vmatpush1.bf16.msra.mxu0 0
        %1554 = vmatprep.subr.bf16.mxu0 0
        %1555 = vmatpush1.bf16.msra.mxu0 0
        %1556 = vmatprep.subr.bf16.mxu0 0
        %1557 = vmatpush1.bf16.msra.mxu0 0
        %1558 = vmatprep.subr.bf16.mxu0 0
        %1559 = vmatpush1.bf16.msra.mxu0 0
        %1560 = vmatprep.subr.bf16.mxu0 0
        %1561 = vmatpush1.bf16.msra.mxu0 0
        %1562 = vmatprep.subr.bf16.mxu0 0
        %1563 = vmatpush1.bf16.msra.mxu0 0
        %1564 = vmatprep.subr.bf16.mxu0 0
        %1565 = vmatpush1.bf16.msra.mxu0 0
        %1566 = vmatprep.subr.bf16.mxu0 0
        %1567 = vmatpush1.bf16.msra.mxu0 0
        %1568 = vmatprep.subr.bf16.mxu0 0
        %1569 = vmatpush1.bf16.msra.mxu0 0
        %1570 = vmatprep.subr.bf16.mxu0 0
        %1571 = vmatpush1.bf16.msra.mxu0 0
        %1572 = vmatprep.subr.bf16.mxu0 0
        %1573 = vmatpush1.bf16.msra.mxu0 0
        %1574 = vmatprep.subr.bf16.mxu0 0
        %1575 = vmatpush1.bf16.msra.mxu0 0
        %1576 = vmatprep.subr.bf16.mxu0 0
        %1577 = vmatpush1.bf16.msra.mxu0 0
        %1578 = vmatprep.subr.bf16.mxu0 0
        %1579 = vmatpush1.bf16.msra.mxu0 0
        %1580 = vmatprep.subr.bf16.mxu0 0
        %1581 = vmatpush1.bf16.msra.mxu0 0
        %1582 = vmatprep.mubr.bf16.mxu0 0
        %1583 = vmatmul.mubr.bf16.gmra.mrb[0].mxu0 %v1544
        %v1584 = vpop.f32.mrb[0].mxu0
        %v1585 = vadd.f32 0.0, %v1584
        %v1586 = vpop.f32.mrb[0].mxu0
        %v1587 = vpop.f32.mrb[0].mxu0
        %v1588 = vpop.f32.mrb[0].mxu0
        %1589 = vdwg.mxu0
        %v1591 = vsel %vm1310, %v1540, 0
        %v1594 = vsel %vm1546, %v1303, 0
        %1596 = vmatprep.subr.bf16.mxu0 0
        %1597 = vmatpush1.bf16.msra.mxu0 %v1594
        %1598 = vmatprep.subr.bf16.mxu0 0
        %1599 = vmatpush1.bf16.msra.mxu0 0
        %1600 = vmatprep.subr.bf16.mxu0 0
        %1601 = vmatpush1.bf16.msra.mxu0 0
        %1602 = vmatprep.subr.bf16.mxu0 0
        %1603 = vmatpush1.bf16.msra.mxu0 0
        %1604 = vmatprep.subr.bf16.mxu0 0
        %1605 = vmatpush1.bf16.msra.mxu0 0
        %1606 = vmatprep.subr.bf16.mxu0 0
        %1607 = vmatpush1.bf16.msra.mxu0 0
        %1608 = vmatprep.subr.bf16.mxu0 0
        %1609 = vmatpush1.bf16.msra.mxu0 0
        %1610 = vmatprep.subr.bf16.mxu0 0
        %1611 = vmatpush1.bf16.msra.mxu0 0
        %1612 = vmatprep.subr.bf16.mxu0 0
        %1613 = vmatpush1.bf16.msra.mxu0 0
        %1614 = vmatprep.subr.bf16.mxu0 0
        %1615 = vmatpush1.bf16.msra.mxu0 0
        %1616 = vmatprep.subr.bf16.mxu0 0
        %1617 = vmatpush1.bf16.msra.mxu0 0
        %1618 = vmatprep.subr.bf16.mxu0 0
        %1619 = vmatpush1.bf16.msra.mxu0 0
        %1620 = vmatprep.subr.bf16.mxu0 0
        %1621 = vmatpush1.bf16.msra.mxu0 0
        %1622 = vmatprep.subr.bf16.mxu0 0
        %1623 = vmatpush1.bf16.msra.mxu0 0
        %1624 = vmatprep.subr.bf16.mxu0 0
        %1625 = vmatpush1.bf16.msra.mxu0 0
        %1626 = vmatprep.subr.bf16.mxu0 0
        %1627 = vmatpush1.bf16.msra.mxu0 0
        %1628 = vmatprep.mubr.bf16.mxu0 0
        %1629 = vmatmul.mubr.bf16.gmra.mrb[0].mxu0 %v1591
        %v1630 = vpop.f32.mrb[0].mxu0
        %v1631 = vadd.f32 0.0, %v1630
        %v1632 = vpop.f32.mrb[0].mxu0
        %v1633 = vpop.f32.mrb[0].mxu0
        %v1634 = vpop.f32.mrb[0].mxu0
        %1635 = vdwg.mxu0
        %v1637 = vsel %vm1310, %v1541, 0
        %v1640 = vsel %vm1546, %v1306, 0
        %1642 = vmatprep.subr.bf16.mxu0 0
        %1643 = vmatpush1.bf16.msra.mxu0 %v1640
        %1644 = vmatprep.subr.bf16.mxu0 0
        %1645 = vmatpush1.bf16.msra.mxu0 0
        %1646 = vmatprep.subr.bf16.mxu0 0
        %1647 = vmatpush1.bf16.msra.mxu0 0
        %1648 = vmatprep.subr.bf16.mxu0 0
        %1649 = vmatpush1.bf16.msra.mxu0 0
        %1650 = vmatprep.subr.bf16.mxu0 0
        %1651 = vmatpush1.bf16.msra.mxu0 0
        %1652 = vmatprep.subr.bf16.mxu0 0
        %1653 = vmatpush1.bf16.msra.mxu0 0
        %1654 = vmatprep.subr.bf16.mxu0 0
        %1655 = vmatpush1.bf16.msra.mxu0 0
        %1656 = vmatprep.subr.bf16.mxu0 0
        %1657 = vmatpush1.bf16.msra.mxu0 0
        %1658 = vmatprep.subr.bf16.mxu0 0
        %1659 = vmatpush1.bf16.msra.mxu0 0
        %1660 = vmatprep.subr.bf16.mxu0 0
        %1661 = vmatpush1.bf16.msra.mxu0 0
        %1662 = vmatprep.subr.bf16.mxu0 0
        %1663 = vmatpush1.bf16.msra.mxu0 0
        %1664 = vmatprep.subr.bf16.mxu0 0
        %1665 = vmatpush1.bf16.msra.mxu0 0
        %1666 = vmatprep.subr.bf16.mxu0 0
        %1667 = vmatpush1.bf16.msra.mxu0 0
        %1668 = vmatprep.subr.bf16.mxu0 0
        %1669 = vmatpush1.bf16.msra.mxu0 0
        %1670 = vmatprep.subr.bf16.mxu0 0
        %1671 = vmatpush1.bf16.msra.mxu0 0
        %1672 = vmatprep.subr.bf16.mxu0 0
        %1673 = vmatpush1.bf16.msra.mxu0 0
        %1674 = vmatprep.mubr.bf16.mxu0 0
        %1675 = vmatmul.mubr.bf16.gmra.mrb[0].mxu0 %v1637
        %v1676 = vpop.f32.mrb[0].mxu0
        %v1677 = vadd.f32 0.0, %v1676
        %v1678 = vpop.f32.mrb[0].mxu0
        %v1679 = vpop.f32.mrb[0].mxu0
        %v1680 = vpop.f32.mrb[0].mxu0
        %1681 = vdwg.mxu0
        %v1683 = vsel %vm1310, %v1542, 0
        %v1686 = vsel %vm1546, %v1309, 0
        %1688 = vmatprep.subr.bf16.mxu0 0
        %1689 = vmatpush1.bf16.msra.mxu0 %v1686
        %1690 = vmatprep.subr.bf16.mxu0 0
        %1691 = vmatpush1.bf16.msra.mxu0 0
        %1692 = vmatprep.subr.bf16.mxu0 0
        %1693 = vmatpush1.bf16.msra.mxu0 0
        %1694 = vmatprep.subr.bf16.mxu0 0
        %1695 = vmatpush1.bf16.msra.mxu0 0
        %1696 = vmatprep.subr.bf16.mxu0 0
        %1697 = vmatpush1.bf16.msra.mxu0 0
        %1698 = vmatprep.subr.bf16.mxu0 0
        %1699 = vmatpush1.bf16.msra.mxu0 0
        %1700 = vmatprep.subr.bf16.mxu0 0
        %1701 = vmatpush1.bf16.msra.mxu0 0
        %1702 = vmatprep.subr.bf16.mxu0 0
        %1703 = vmatpush1.bf16.msra.mxu0 0
        %1704 = vmatprep.subr.bf16.mxu0 0
        %1705 = vmatpush1.bf16.msra.mxu0 0
        %1706 = vmatprep.subr.bf16.mxu0 0
        %1707 = vmatpush1.bf16.msra.mxu0 0
        %1708 = vmatprep.subr.bf16.mxu0 0
        %1709 = vmatpush1.bf16.msra.mxu0 0
        %1710 = vmatprep.subr.bf16.mxu0 0
        %1711 = vmatpush1.bf16.msra.mxu0 0
        %1712 = vmatprep.subr.bf16.mxu0 0
        %1713 = vmatpush1.bf16.msra.mxu0 0
        %1714 = vmatprep.subr.bf16.mxu0 0
        %1715 = vmatpush1.bf16.msra.mxu0 0
        %1716 = vmatprep.subr.bf16.mxu0 0
        %1717 = vmatpush1.bf16.msra.mxu0 0
        %1718 = vmatprep.subr.bf16.mxu0 0
        %1719 = vmatpush1.bf16.msra.mxu0 0
        %1720 = vmatprep.mubr.bf16.mxu0 0
        %1721 = vmatmul.mubr.bf16.gmra.mrb[0].mxu0 %v1683
        %v1722 = vpop.f32.mrb[0].mxu0
        %v1723 = vadd.f32 0.0, %v1722
        %v1724 = vpop.f32.mrb[0].mxu0
        %v1725 = vpop.f32.mrb[0].mxu0
        %v1726 = vpop.f32.mrb[0].mxu0
        %1727 = vdwg.mxu0
        %v1728 = vcombine.low %v1585, %v1677
        %v1729 = vcombine.high %v1585, %v1677
        %v1731 = vunpack.c.l.s4 1983009808
        %v1732 = vunpack.c.0.s8 %v1731
        %v1733 = vlaneseq
        %v1734 = vshrl.u32 %v1733, 7
        %v1735 = vsub.s32 %v1732, %v1734
        %v1736 = vrot.slane %v1728, %v1735
        %v1738 = vunpack.c.l.s4 1983009808
        %v1739 = vunpack.c.0.s8 %v1738
        %v1740 = vlaneseq
        %v1741 = vshrl.u32 %v1740, 7
        %v1742 = vsub.s32 %v1739, %v1741
        %v1743 = vrot.slane %v1729, %v1742
        %v1744 = vcombine.low %v1631, %v1723
        %v1745 = vcombine.high %v1631, %v1723
        %v1747 = vunpack.c.l.s4 1983009808
        %v1748 = vunpack.c.0.s8 %v1747
        %v1749 = vlaneseq
        %v1750 = vshrl.u32 %v1749, 7
        %v1751 = vsub.s32 %v1748, %v1750
        %v1752 = vrot.slane %v1744, %v1751
        %v1754 = vunpack.c.l.s4 1983009808
        %v1755 = vunpack.c.0.s8 %v1754
        %v1756 = vlaneseq
        %v1757 = vshrl.u32 %v1756, 7
        %v1758 = vsub.s32 %v1755, %v1757
        %v1759 = vrot.slane %v1745, %v1758
        %v1760 = vcombine.low %v1736, %v1752
        %v1761 = vcombine.high %v1736, %v1752
        %v1763 = vunpack.c.l.s4 1934713408
        %v1764 = vunpack.c.0.s8 %v1763
        %v1765 = vlaneseq
        %v1766 = vshrl.u32 %v1765, 7
        %v1767 = vsub.s32 %v1764, %v1766
        %v1768 = vrot.slane %v1760, %v1767
        %v1770 = vunpack.c.l.s4 1934713408
        %v1771 = vunpack.c.0.s8 %v1770
        %v1772 = vlaneseq
        %v1773 = vshrl.u32 %v1772, 7
        %v1774 = vsub.s32 %v1771, %v1773
        %v1775 = vrot.slane %v1761, %v1774
        %v1776 = vcombine.low %v1743, %v1759
        %v1777 = vcombine.high %v1743, %v1759
        %v1779 = vunpack.c.l.s4 1934713408
        %v1780 = vunpack.c.0.s8 %v1779
        %v1781 = vlaneseq
        %v1782 = vshrl.u32 %v1781, 7
        %v1783 = vsub.s32 %v1780, %v1782
        %v1784 = vrot.slane %v1776, %v1783
        %v1786 = vunpack.c.l.s4 1934713408
        %v1787 = vunpack.c.0.s8 %v1786
        %v1788 = vlaneseq
        %v1789 = vshrl.u32 %v1788, 7
        %v1790 = vsub.s32 %v1787, %v1789
        %v1791 = vrot.slane %v1777, %v1790
        %v1792 = vcombine.high %v1768, 0.0
        %v1793 = vcombine.high %v1775, 0.0
        %v1794 = vcombine.high %v1784, 0.0
        %v1795 = vcombine.high %v1791, 0.0
        %v1796 = vcombine.low %v1768, %v1775
        %v1798 = vunpack.c.l.s4 1983009808
        %v1799 = vunpack.c.0.s8 %v1798
        %v1800 = vlaneseq
        %v1801 = vshrl.u32 %v1800, 7
        %v1802 = vsub.s32 %v1799, %v1801
        %v1803 = vrot.slane %v1796, %v1802
        %v1804 = vcombine.low %v1792, %v1793
        %v1806 = vunpack.c.l.s4 1983009808
        %v1807 = vunpack.c.0.s8 %v1806
        %v1808 = vlaneseq
        %v1809 = vshrl.u32 %v1808, 7
        %v1810 = vsub.s32 %v1807, %v1809
        %v1811 = vrot.slane %v1804, %v1810
        %v1812 = vcombine.low %v1784, %v1791
        %v1814 = vunpack.c.l.s4 1983009808
        %v1815 = vunpack.c.0.s8 %v1814
        %v1816 = vlaneseq
        %v1817 = vshrl.u32 %v1816, 7
        %v1818 = vsub.s32 %v1815, %v1817
        %v1819 = vrot.slane %v1812, %v1818
        %v1820 = vcombine.low %v1794, %v1795
        %v1822 = vunpack.c.l.s4 1983009808
        %v1823 = vunpack.c.0.s8 %v1822
        %v1824 = vlaneseq
        %v1825 = vshrl.u32 %v1824, 7
        %v1826 = vsub.s32 %v1823, %v1825
        %v1827 = vrot.slane %v1820, %v1826
        %v1828 = vcombine.low %v1803, %v1811
        %v1829 = vcombine.high %v1803, %v1811
        %v1831 = vunpack.c.l.s4 1934713408
        %v1832 = vunpack.c.0.s8 %v1831
        %v1833 = vlaneseq
        %v1834 = vshrl.u32 %v1833, 7
        %v1835 = vsub.s32 %v1832, %v1834
        %v1836 = vrot.slane %v1828, %v1835
        %v1838 = vunpack.c.l.s4 1934713408
        %v1839 = vunpack.c.0.s8 %v1838
        %v1840 = vlaneseq
        %v1841 = vshrl.u32 %v1840, 7
        %v1842 = vsub.s32 %v1839, %v1841
        %v1843 = vrot.slane %v1829, %v1842
        %v1844 = vcombine.low %v1819, %v1827
        %v1845 = vcombine.high %v1819, %v1827
        %v1847 = vunpack.c.l.s4 1934713408
        %v1848 = vunpack.c.0.s8 %v1847
        %v1849 = vlaneseq
        %v1850 = vshrl.u32 %v1849, 7
        %v1851 = vsub.s32 %v1848, %v1850
        %v1852 = vrot.slane %v1844, %v1851
        %v1854 = vunpack.c.l.s4 1934713408
        %v1855 = vunpack.c.0.s8 %v1854
        %v1856 = vlaneseq
        %v1857 = vshrl.u32 %v1856, 7
        %v1858 = vsub.s32 %v1855, %v1857
        %v1859 = vrot.slane %v1845, %v1858
        %v1860 = vcombine.low %v1836, %v1852
        %v1861 = vcombine.high %v1836, %v1852
        %v1862 = vcombine.low %v1843, %v1859
        %v1863 = vcombine.high %v1843, %v1859
        %1865 = vrot.lane.b32.xlu0 %v1861, 8
        %v1866 = vpop.permute.xlu0 %1865
        %1869 = vrot.lane.b32.xlu0 %v1862, 16
        %v1870 = vpop.permute.xlu0 %1869
        %1873 = vrot.lane.b32.xlu0 %v1863, 24
        %v1874 = vpop.permute.xlu0 %1873
        %v1876 = vsel %vm1310, %v1860, %v1866
        %vm1877 = vcmask 130048
        %v1878 = vsel %vm1877, %v1876, %v1870
        %vm1879 = vcmask 195584
        %v1880 = vsel %vm1879, %v1878, %v1874
        %v1881 = vpack.c.bf16 %v1880, %v1880
        %v1882 = vld [vmem:[%s668] sm:$0xf]
        %v1883 = vld [vmem:[%s668 + $0x4] sm:$0xf]
        %v1884 = vld [vmem:[%s668 + $0x8] sm:$0xf]
        %v1885 = vld [vmem:[%s668 + $0xc] sm:$0xf]
        %v1886 = vld [vmem:[%s671] sm:$0x1]
        %v1888 = vlaneseq
        %v1889 = vshrl.u32 %v1888, 7
        %v1890 = vsub.s32 0, %v1889
        %v1891 = vrot.slane %v1886, %v1890
        %v1897 = vunpack.c.l.b16 %v1882
        %v1898 = vunpack.c.l.b16 %v1883
        %v1899 = vunpack.c.l.b16 %v1884
        %v1900 = vunpack.c.l.b16 %v1885
        %v1901 = vpack.c.b16 %v1898, %v1897
        %v1902 = vpack.c.b16 %v1900, %v1899
        %v1906 = vsel %vm705, %v1881, 0
        %1908 = vmatprep.subr.bf16.mxu0 0
        %1909 = vmatpush1.bf16.msra.mxu0 %v1901
        %1910 = vmatprep.subr.bf16.mxu0 0
        %1911 = vmatpush1.bf16.msra.mxu0 %v1902
        %1912 = vmatprep.subr.bf16.mxu0 0
        %1913 = vmatpush1.bf16.msra.mxu0 0
        %1914 = vmatprep.subr.bf16.mxu0 0
        %1915 = vmatpush1.bf16.msra.mxu0 0
        %1916 = vmatprep.subr.bf16.mxu0 0
        %1917 = vmatpush1.bf16.msra.mxu0 0
        %1918 = vmatprep.subr.bf16.mxu0 0
        %1919 = vmatpush1.bf16.msra.mxu0 0
        %1920 = vmatprep.subr.bf16.mxu0 0
        %1921 = vmatpush1.bf16.msra.mxu0 0
        %1922 = vmatprep.subr.bf16.mxu0 0
        %1923 = vmatpush1.bf16.msra.mxu0 0
        %1924 = vmatprep.subr.bf16.mxu0 0
        %1925 = vmatpush1.bf16.msra.mxu0 0
        %1926 = vmatprep.subr.bf16.mxu0 0
        %1927 = vmatpush1.bf16.msra.mxu0 0
        %1928 = vmatprep.subr.bf16.mxu0 0
        %1929 = vmatpush1.bf16.msra.mxu0 0
        %1930 = vmatprep.subr.bf16.mxu0 0
        %1931 = vmatpush1.bf16.msra.mxu0 0
        %1932 = vmatprep.subr.bf16.mxu0 0
        %1933 = vmatpush1.bf16.msra.mxu0 0
        %1934 = vmatprep.subr.bf16.mxu0 0
        %1935 = vmatpush1.bf16.msra.mxu0 0
        %1936 = vmatprep.subr.bf16.mxu0 0
        %1937 = vmatpush1.bf16.msra.mxu0 0
        %1938 = vmatprep.subr.bf16.mxu0 0
        %1939 = vmatpush1.bf16.msra.mxu0 0
        %1940 = vmatprep.mubr.bf16.mxu0 0
        %1941 = vmatmul.mubr.bf16.gmra.mrb[0].mxu0 %v1906
        %v1942 = vpop.f32.mrb[0].mxu0
        %v1943 = vadd.f32 %v1891, %v1942
        %v1944 = vpop.f32.mrb[0].mxu0
        %v1945 = vpop.f32.mrb[0].mxu0
        %v1946 = vpop.f32.mrb[0].mxu0
        %1947 = vdwg.mxu0
        %v1948 = vadd.f32 %v702, %v1943
        %v1949 = vld [vmem:[%s674] sm:$0x1]
        %v1950 = vld [vmem:[%s677] sm:$0x1]
        %v1951 = vsel %vm705, %v1948, 0.0
        %1952 = vadd.xlane.f32.xlu0 %v1951
        %v1953 = vpop.xlane.xlu0 %1952
        %v1954 = vmul.f32 %v1953, %v709
        %v1955 = vsub.f32 %v1948, %v1954
        %v1956 = vmul.f32 %v1955, %v1955
        %v1957 = vsel %vm705, %v1956, 0.0
        %1958 = vadd.xlane.f32.xlu0 %v1957
        %v1959 = vpop.xlane.xlu0 %1958
        %v1960 = vmul.f32 %v1959, %v709
        %v1961 = vadd.f32 %v1960, 1e-05
        %v1962 = vrsqrt.pop %v1961
        %v1963 = vmul.f32 %v1955, %v1962
        %v1965 = vlaneseq
        %v1966 = vshrl.u32 %v1965, 7
        %v1967 = vsub.s32 0, %v1966
        %v1968 = vrot.slane %v1949, %v1967
        %v1970 = vmul.f32 %v1963, %v1968
        %v1972 = vlaneseq
        %v1973 = vshrl.u32 %v1972, 7
        %v1974 = vsub.s32 0, %v1973
        %v1975 = vrot.slane %v1950, %v1974
        %v1977 = vadd.f32 %v1970, %v1975
        %v1978 = vpack.c.bf16 %v1977, %v1977
        %v1979 = vld [vmem:[%s682] sm:$0xf]
        %v1980 = vld [vmem:[%s682 + $0x4] sm:$0xf]
        %v1981 = vld [vmem:[%s682 + $0x8] sm:$0xf]
        %v1982 = vld [vmem:[%s682 + $0xc] sm:$0xf]
        %v1983 = vld [vmem:[%s685] sm:$0x1]
        %v1985 = vlaneseq
        %v1986 = vshrl.u32 %v1985, 7
        %v1987 = vsub.s32 0, %v1986
        %v1988 = vrot.slane %v1983, %v1987
        %v1994 = vunpack.c.l.b16 %v1979
        %v1995 = vunpack.c.l.b16 %v1980
        %v1996 = vunpack.c.l.b16 %v1981
        %v1997 = vunpack.c.l.b16 %v1982
        %v1998 = vpack.c.b16 %v1995, %v1994
        %v1999 = vpack.c.b16 %v1997, %v1996
        %v2003 = vsel %vm705, %v1978, 0
        %2005 = vmatprep.subr.bf16.mxu0 0
        %2006 = vmatpush1.bf16.msra.mxu0 %v1998
        %2007 = vmatprep.subr.bf16.mxu0 0
        %2008 = vmatpush1.bf16.msra.mxu0 %v1999
        %2009 = vmatprep.subr.bf16.mxu0 0
        %2010 = vmatpush1.bf16.msra.mxu0 0
        %2011 = vmatprep.subr.bf16.mxu0 0
        %2012 = vmatpush1.bf16.msra.mxu0 0
        %2013 = vmatprep.subr.bf16.mxu0 0
        %2014 = vmatpush1.bf16.msra.mxu0 0
        %2015 = vmatprep.subr.bf16.mxu0 0
        %2016 = vmatpush1.bf16.msra.mxu0 0
        %2017 = vmatprep.subr.bf16.mxu0 0
        %2018 = vmatpush1.bf16.msra.mxu0 0
        %2019 = vmatprep.subr.bf16.mxu0 0
        %2020 = vmatpush1.bf16.msra.mxu0 0
        %2021 = vmatprep.subr.bf16.mxu0 0
        %2022 = vmatpush1.bf16.msra.mxu0 0
        %2023 = vmatprep.subr.bf16.mxu0 0
        %2024 = vmatpush1.bf16.msra.mxu0 0
        %2025 = vmatprep.subr.bf16.mxu0 0
        %2026 = vmatpush1.bf16.msra.mxu0 0
        %2027 = vmatprep.subr.bf16.mxu0 0
        %2028 = vmatpush1.bf16.msra.mxu0 0
        %2029 = vmatprep.subr.bf16.mxu0 0
        %2030 = vmatpush1.bf16.msra.mxu0 0
        %2031 = vmatprep.subr.bf16.mxu0 0
        %2032 = vmatpush1.bf16.msra.mxu0 0
        %2033 = vmatprep.subr.bf16.mxu0 0
        %2034 = vmatpush1.bf16.msra.mxu0 0
        %2035 = vmatprep.subr.bf16.mxu0 0
        %2036 = vmatpush1.bf16.msra.mxu0 0
        %2037 = vmatprep.mubr.bf16.mxu0 0
        %2038 = vmatmul.mubr.bf16.gmra.mrb[0].mxu0 %v2003
        %v2039 = vpop.f32.mrb[0].mxu0
        %v2040 = vadd.f32 %v1988, %v2039
        %v2041 = vpop.f32.mrb[0].mxu0
        %v2042 = vpop.f32.mrb[0].mxu0
        %v2043 = vpop.f32.mrb[0].mxu0
        %2044 = vdwg.mxu0
        %v2045 = vmul.f32 %v2040, 0.5
        %v2046 = vmul.f32 %v2040, 0.70710677
        %v2047 = verf.f32.pop %v2046
        %v2048 = vadd.f32 %v2047, 1.0
        %v2049 = vmul.f32 %v2045, %v2048
        %v2050 = vpack.c.bf16 %v2049, %v2049
        %v2051 = vld [vmem:[%s690] sm:$0xf]
        %v2052 = vld [vmem:[%s690 + $0x4] sm:$0xf]
        %v2053 = vld [vmem:[%s690 + $0x8] sm:$0xf]
        %v2054 = vld [vmem:[%s690 + $0xc] sm:$0xf]
        %v2055 = vld [vmem:[%s690 + $0x10] sm:$0xf]
        %v2056 = vld [vmem:[%s690 + $0x14] sm:$0xf]
        %v2057 = vld [vmem:[%s690 + $0x18] sm:$0xf]
        %v2058 = vld [vmem:[%s690 + $0x1c] sm:$0xf]
        %v2059 = vld [vmem:[%s690 + $0x20] sm:$0xf]
        %v2060 = vld [vmem:[%s690 + $0x24] sm:$0xf]
        %v2061 = vld [vmem:[%s690 + $0x28] sm:$0xf]
        %v2062 = vld [vmem:[%s690 + $0x2c] sm:$0xf]
        %v2063 = vld [vmem:[%s690 + $0x30] sm:$0xf]
        %v2064 = vld [vmem:[%s690 + $0x34] sm:$0xf]
        %v2065 = vld [vmem:[%s690 + $0x38] sm:$0xf]
        %v2066 = vld [vmem:[%s690 + $0x3c] sm:$0xf]
        %v2067 = vld [vmem:[%s693] sm:$0x1]
        %v2069 = vlaneseq
        %v2070 = vshrl.u32 %v2069, 7
        %v2071 = vsub.s32 0, %v2070
        %v2072 = vrot.slane %v2067, %v2071
        %v2090 = vunpack.c.l.b16 %v2051
        %v2091 = vunpack.c.l.b16 %v2052
        %v2092 = vunpack.c.l.b16 %v2053
        %v2093 = vunpack.c.l.b16 %v2054
        %v2094 = vunpack.c.l.b16 %v2055
        %v2095 = vunpack.c.l.b16 %v2056
        %v2096 = vunpack.c.l.b16 %v2057
        %v2097 = vunpack.c.l.b16 %v2058
        %v2098 = vunpack.c.l.b16 %v2059
        %v2099 = vunpack.c.l.b16 %v2060
        %v2100 = vunpack.c.l.b16 %v2061
        %v2101 = vunpack.c.l.b16 %v2062
        %v2102 = vunpack.c.l.b16 %v2063
        %v2103 = vunpack.c.l.b16 %v2064
        %v2104 = vunpack.c.l.b16 %v2065
        %v2105 = vunpack.c.l.b16 %v2066
        %v2106 = vpack.c.b16 %v2091, %v2090
        %v2107 = vpack.c.b16 %v2093, %v2092
        %v2108 = vpack.c.b16 %v2095, %v2094
        %v2109 = vpack.c.b16 %v2097, %v2096
        %v2110 = vpack.c.b16 %v2099, %v2098
        %v2111 = vpack.c.b16 %v2101, %v2100
        %v2112 = vpack.c.b16 %v2103, %v2102
        %v2113 = vpack.c.b16 %v2105, %v2104
        %2122 = vmatprep.subr.bf16.mxu0 0
        %2123 = vmatpush1.bf16.msra.mxu0 %v2106
        %2124 = vmatprep.subr.bf16.mxu0 0
        %2125 = vmatpush1.bf16.msra.mxu0 %v2107
        %2126 = vmatprep.subr.bf16.mxu0 0
        %2127 = vmatpush1.bf16.msra.mxu0 %v2108
        %2128 = vmatprep.subr.bf16.mxu0 0
        %2129 = vmatpush1.bf16.msra.mxu0 %v2109
        %2130 = vmatprep.subr.bf16.mxu0 0
        %2131 = vmatpush1.bf16.msra.mxu0 %v2110
        %2132 = vmatprep.subr.bf16.mxu0 0
        %2133 = vmatpush1.bf16.msra.mxu0 %v2111
        %2134 = vmatprep.subr.bf16.mxu0 0
        %2135 = vmatpush1.bf16.msra.mxu0 %v2112
        %2136 = vmatprep.subr.bf16.mxu0 0
        %2137 = vmatpush1.bf16.msra.mxu0 %v2113
        %2138 = vmatprep.subr.bf16.mxu0 0
        %2139 = vmatpush1.bf16.msra.mxu0 0
        %2140 = vmatprep.subr.bf16.mxu0 0
        %2141 = vmatpush1.bf16.msra.mxu0 0
        %2142 = vmatprep.subr.bf16.mxu0 0
        %2143 = vmatpush1.bf16.msra.mxu0 0
        %2144 = vmatprep.subr.bf16.mxu0 0
        %2145 = vmatpush1.bf16.msra.mxu0 0
        %2146 = vmatprep.subr.bf16.mxu0 0
        %2147 = vmatpush1.bf16.msra.mxu0 0
        %2148 = vmatprep.subr.bf16.mxu0 0
        %2149 = vmatpush1.bf16.msra.mxu0 0
        %2150 = vmatprep.subr.bf16.mxu0 0
        %2151 = vmatpush1.bf16.msra.mxu0 0
        %2152 = vmatprep.subr.bf16.mxu0 0
        %2153 = vmatpush1.bf16.msra.mxu0 0
        %2154 = vmatprep.mubr.bf16.mxu0 0
        %2155 = vmatmul.mubr.bf16.gmra.mrb[0].mxu0 %v2050
        %v2156 = vpop.f32.mrb[0].mxu0
        %v2157 = vadd.f32 %v2072, %v2156
        %v2158 = vpop.f32.mrb[0].mxu0
        %v2159 = vpop.f32.mrb[0].mxu0
        %v2160 = vpop.f32.mrb[0].mxu0
        %2161 = vdwg.mxu0
        %v2162 = vadd.f32 %v1948, %v2157
        %2163 = vst.msk [vmem:[#allocation2] sm:$0xff] %vm705, %v2162
        %p2164 = scmp.eq.s32.totalorder %s34, 1
        // Predicated region
        $region85: #{_lambda_.1} parent=79 // pred_check
          %p2165 = pneg %p2164
        $region86: #{_lambda_.1} parent=79 // pred_check_branch
          %2167 = sbr.rel (%p2165) target = $region88
        $region87: #{_lambda_.1} parent=79 // pred_region
          %v2168 = vld [vmem:[%s13] sm:$0x1]
          %v2169 = vld [vmem:[%s14] sm:$0x1]
          %v2170 = vsel %vm705, %v2162, 0.0
          %2171 = vadd.xlane.f32.xlu0 %v2170
          %v2172 = vpop.xlane.xlu0 %2171
          %v2173 = vmul.f32 %v2172, %v709
          %v2174 = vsub.f32 %v2162, %v2173
          %v2175 = vmul.f32 %v2174, %v2174
          %v2176 = vsel %vm705, %v2175, 0.0
          %2177 = vadd.xlane.f32.xlu0 %v2176
          %v2178 = vpop.xlane.xlu0 %2177
          %v2179 = vmul.f32 %v2178, %v709
          %v2180 = vadd.f32 %v2179, 1e-05
          %v2181 = vrsqrt.pop %v2180
          %v2182 = vmul.f32 %v2174, %v2181
          %v2184 = vlaneseq
          %v2185 = vshrl.u32 %v2184, 7
          %v2186 = vsub.s32 0, %v2185
          %v2187 = vrot.slane %v2168, %v2186
          %v2189 = vmul.f32 %v2182, %v2187
          %v2191 = vlaneseq
          %v2192 = vshrl.u32 %v2191, 7
          %v2193 = vsub.s32 0, %v2192
          %v2194 = vrot.slane %v2169, %v2193
          %v2196 = vadd.f32 %v2189, %v2194
          %2197 = vst.msk [vmem:[%s645] sm:$0xff] %vm705, %v2196
        $region88: #{_lambda_.1} parent=79 // pred_fallthru
          _
        %s2198 = sand.u32 %s429, 1
        %s2199 = scalar_lea.sflag [#allocation4], %s2198
        %s2200 = sand.u32 %s429, 1
        %s2201 = smul.addr %s2200, 8
        %s2202 = scalar_lea.vmem [#allocation3], %s2201
        // Predicated region
        $region89: #{_lambda_.1} parent=79 // pred_check
          %p2203 = pneg %p439
        $region90: #{_lambda_.1} parent=79 // pred_check_branch
          %2205 = sbr.rel (%p2203) target = $region92
        $region91: #{_lambda_.1} parent=79 // pred_region
          %s2207 = ssub.s32 128, 128
          %2208 = vsyncadd %s2199, %s2207
          %s2209 = smul.addr %s33, 128
          %s2210 = scalar_lea.hbm %s15, %s2209
          %s2212 = sshll.u32 %s2202, 4
          %s2213 = int_to_ptr.vmem [resolvable:$true] %s2212
          %2215 = dma.vmem_to_hbm [thread:$0]  %s2213, 128, %s2210, %s2199
        $region92: #{_lambda_.1} parent=79 // pred_fallthru
          _
      $region80: #{_lambda_.1} parent=5 // pred_fallthru
        _
      %p2216 = scmp.le.s32.totalorder 2, %s24
      // Predicated region
      $region93: #{_lambda_.1} parent=5 // pred_check
        %p2217 = pneg %p2216
      $region94: #{_lambda_.1} parent=5 // pred_check_branch
        %2219 = sbr.rel (%p2217) target = $region96
      $region95: #{_lambda_.1} parent=5 // pred_region
        %s2220 = ssub.s32 %s24, 2
        // Predicated region
        $region97: #{_lambda_.1} parent=95 // pred_check
          %p2221 = pneg %p445
        $region98: #{_lambda_.1} parent=95 // pred_check_branch
          %2223 = sbr.rel (%p2221) target = $region100
        $region99: #{_lambda_.1} parent=95 // pred_region
          %s2224 = sand.u32 %s430, 1
          %s2225 = scalar_lea.sflag [#allocation4], %s2224
          %s2226 = sand.u32 %s430, 1
          %s2227 = smul.addr %s2226, 8
          %s2228 = scalar_lea.vmem [#allocation3], %s2227
          %2229 = dma.done %s2225, 128
        $region100: #{_lambda_.1} parent=95 // pred_fallthru
          _
      $region96: #{_lambda_.1} parent=5 // pred_fallthru
        _
    $region6: #{_lambda_.1} parent=1 // loop_footer
      %s28 = sadd.s32 1, %s24
    $region7: #{_lambda_.1} parent=1 // loop_footer_branch
      %23 = sbr.rel target = $region3
    $region8: #{_lambda_.1} parent=1 // loop_exit
      _
    %2230 = vsyncpa [#allocation4], 1
    %s2231 = scalar_lea.sflag [#allocation4], 1
    %2232 = vsyncpa %s2231, 1

</llo_original>
